<compile_context>
chip_gen: v5e
topology: v5e:2x2
jax: 0.10.0
libtpu: 0.0.40
codegen_flags: <defaults>
</compile_context>

<pallas_src>
import jax
import jax.numpy as jnp
from jax.experimental import pallas as pl
from jax.experimental.pallas import tpu as pltpu


def _round_up(x, m):
    return ((x + m - 1) // m) * m


# ----------------------------------------------------------------------------
# Fused per-domain kernel: score head + feature layer in three block matmuls.
# ----------------------------------------------------------------------------
def _fused_domain_kernel(g_ref, x_ref, w1_ref, w2_ref, b2_ref, w3_ref, o_ref):
    """One token tile through both heads.

      z1 = relu(x @ W1_fused + g[b])          # [score(128) | feature(Cf1)]
      z2 = relu(z1 @ blockdiag(W2s,W2f) + b2) # [score(64)  | feature(Cf2)]
      z3 = z2 @ W3_block                      # lanes 0..63 feature, 64..127 score logit
      out = [ z3 * rsqrt(sumsq_feat) | sigmoid(z3) ]   (lane-masked epilogue)
    """
    x = x_ref[0]                       # (tile, Cin) bf16
    g = g_ref[0]                       # (1, N1) f32: BN1 bias + global-feature term

    z = jnp.dot(x, w1_ref[...], preferred_element_type=jnp.float32) + g
    z = jnp.maximum(z, 0.0)
    z = jnp.dot(z.astype(jnp.bfloat16), w2_ref[...],
                preferred_element_type=jnp.float32) + b2_ref[...]
    z = jnp.maximum(z, 0.0)
    z = jnp.dot(z.astype(jnp.bfloat16), w3_ref[...],
                preferred_element_type=jnp.float32)            # (tile, 128)

    lane = jax.lax.broadcasted_iota(jnp.int32, z.shape, 1)
    is_feat = lane < 64
    # F.normalize(p=2): y / max(||y||, 1e-12) == y * rsqrt(max(sumsq, 1e-24)).
    sumsq = jnp.sum(jnp.where(is_feat, z * z, 0.0), axis=-1, keepdims=True)
    inv = jax.lax.rsqrt(jnp.maximum(sumsq, 1e-24))
    out = jnp.where(is_feat, z * inv, jax.nn.sigmoid(z))
    o_ref[0] = out.astype(o_ref.dtype)


def _choose_tile(num_tokens, batch):
    """Tile rows: multiple of 16 (bf16 sublane pack), up to 1024, minimizing
    last-tile padding; keep >= 2 grid steps when batch == 1 (v7x megacore)."""
    t16 = _round_up(num_tokens, 16)
    max_tile = 1024
    if t16 <= max_tile:
        tile = t16
        if batch == 1 and tile >= 32:
            tile = _round_up((tile + 1) // 2, 16)
        return tile
    best_tile = max_tile
    best_pad = _round_up(num_tokens, max_tile) - num_tokens
    for cand in (768, 512, 384, 256):
        pad = _round_up(num_tokens, cand) - num_tokens
        if pad < best_pad:
            best_tile, best_pad = cand, pad
    return best_tile


def fused_heads_pallas(x_tok, g_full, dom):
    """x_tok: (B, T, Cin) bf16 tokens.  g_full: (B, 1, N1) f32 per-batch fused
    stage-1 bias (BN1 bias + BN1-scaled global-feature term on the score half).

    Returns packed (B, T, 128) bf16: lanes 0..63 = L2-normalized feature,
    lanes 64..127 = sigmoid score (broadcast).
    """
    B, T, cin = x_tok.shape
    w1, w2, b2, w3 = dom["w1"], dom["w2"], dom["b2"], dom["w3"]
    n1, n2 = w1.shape[1], w2.shape[1]

    tile = _choose_tile(T, B)
    t_pad = _round_up(T, tile)
    if t_pad != T:
        x_tok = jnp.pad(x_tok, ((0, 0), (0, t_pad - T), (0, 0)))

    grid = (B, t_pad // tile)
    const = lambda a: pl.BlockSpec(a.shape, lambda b_, t_: (0, 0))
    # TODO(synk): constant-index weight specs could be single-buffered via
    # pipeline_mode=pl.Buffered(1); skipped for lowering robustness — VMEM
    # headroom is ample at these operand sizes on every TPU generation.

    flops = int(2 * B * t_pad * (cin * n1 + n1 * n2 + n2 * 128))
    bytes_accessed = int(
        B * t_pad * cin * 2              # x (bf16)
        + B * t_pad * 128 * 2            # packed output (bf16)
        + (w1.size + w2.size + w3.size) * 2
        + (g_full.size + b2.size) * 4)

    out = pl.pallas_call(
        _fused_domain_kernel,
        out_shape=jax.ShapeDtypeStruct((B, t_pad, 128), jnp.bfloat16),
        grid_spec=pltpu.PrefetchScalarGridSpec(
            num_scalar_prefetch=0,
            grid=grid,
            in_specs=[
                pl.BlockSpec((1, 1, n1), lambda b_, t_: (b_, 0, 0)),       # g_full
                pl.BlockSpec((1, tile, cin), lambda b_, t_: (b_, t_, 0)),  # tokens
                const(w1), const(w2), const(b2), const(w3),
            ],
            out_specs=pl.BlockSpec((1, tile, 128), lambda b_, t_: (b_, t_, 0)),
        ),
        compiler_params=pltpu.CompilerParams(
            dimension_semantics=("parallel", "parallel")),
        cost_estimate=pl.CostEstimate(
            flops=flops,
            transcendentals=int(B * t_pad * 80),
            bytes_accessed=bytes_accessed),
    )(g_full, x_tok, w1, w2, b2, w3)
    return out[:, :T]


# ----------------------------------------------------------------------------
# Parameter construction (eval-mode BN folded; heads fused into block matmuls)
# ----------------------------------------------------------------------------
def _fold_bn(gamma, beta, mean, var, eps=1e-5):
    scale = gamma / jnp.sqrt(var + eps)
    bias = beta - mean * scale
    return scale.reshape(1, -1), bias.reshape(1, -1)


def _make_mlp3_params(key, dims):
    """dims = [Cin, C1, C2, Cout]. Conv weights are bias-free (as in module)."""
    ks = jax.random.split(key, 11)
    w1 = jax.random.normal(ks[0], (dims[0], dims[1]), jnp.float32) * 0.05
    w2 = jax.random.normal(ks[1], (dims[1], dims[2]), jnp.float32) * 0.05
    w3 = jax.random.normal(ks[2], (dims[2], dims[3]), jnp.float32) * 0.05
    g1 = jax.random.uniform(ks[3], (dims[1],), jnp.float32, 0.5, 1.5)
    b1 = jax.random.normal(ks[4], (dims[1],), jnp.float32) * 0.1
    m1 = jax.random.normal(ks[5], (dims[1],), jnp.float32) * 0.1
    v1 = jax.random.uniform(ks[6], (dims[1],), jnp.float32, 0.5, 1.5)
    g2 = jax.random.uniform(ks[7], (dims[2],), jnp.float32, 0.5, 1.5)
    b2 = jax.random.normal(ks[8], (dims[2],), jnp.float32) * 0.1
    m2 = jax.random.normal(ks[9], (dims[2],), jnp.float32) * 0.1
    v2 = jax.random.uniform(ks[10], (dims[2],), jnp.float32, 0.5, 1.5)
    s1, bb1 = _fold_bn(g1, b1, m1, v1)
    s2, bb2 = _fold_bn(g2, b2, m2, v2)
    return (w1, s1, bb1, w2, s2, bb2, w3)


def _prep_fused_domain(score_p, feat_p, c_local):
    """Fuse one domain's score head + feature layer into block matmuls.

    Score head : Conv(c_local+512->128) BN ReLU Conv(128->64) BN ReLU Conv(64->1) Sigmoid
    Feature    : Conv(c_local->Cf1) BN ReLU Conv(Cf1->Cf2) BN ReLU Conv(Cf2->64), L2-norm
    BN scales folded into the conv weights; BN biases concatenated per stage;
    the global 512-ch input of the score-head first conv is split off and
    applied as a per-batch bias in the JAX glue.
    """
    w1s, s1s, b1s, w2s, s2s, b2s, w3s = score_p
    w1f, s1f, b1f, w2f, s2f, b2f, w3f = feat_p

    cf1, cf2 = w1f.shape[1], w2f.shape[1]
    n1, n2 = 128 + cf1, 64 + cf2

    # Stage 1: shared-input fused matmul, BN1 scale folded into columns.
    w1 = jnp.concatenate([w1s[:c_local] * s1s, w1f * s1f], axis=1)   # (c_local, n1)
    w1_glob = w1s[c_local:] * s1s                                    # (512, 128)
    b1 = jnp.concatenate([b1s, b1f], axis=1)                         # (1, n1)

    # Stage 2: block-diagonal fused matmul, BN2 scale folded.
    w2 = jnp.zeros((n1, n2), jnp.float32)
    w2 = w2.at[:128, :64].set(w2s * s2s)
    w2 = w2.at[128:, 64:].set(w2f * s2f)
    b2 = jnp.concatenate([b2s, b2f], axis=1)                         # (1, n2)

    # Stage 3: block matmul that directly emits the packed lane-dense output.
    w3 = jnp.zeros((n2, 128), jnp.float32)
    w3 = w3.at[64:, :64].set(w3f)                                    # feature -> lanes 0..63
    w3 = w3.at[:64, 64:].set(
        jnp.broadcast_to(w3s.reshape(64, 1), (64, 64)))              # score logit broadcast

    return {
        "w1": w1.astype(jnp.bfloat16),
        "w2": w2.astype(jnp.bfloat16),
        "w3": w3.astype(jnp.bfloat16),
        "b1": b1,                 # (1, n1) f32 constant part of the stage-1 bias
        "b2": b2,                 # (1, n2) f32
        "w1_global": w1_glob,     # (512, 128) f32, applied in JAX glue
    }


def _stage1_bias(global_feat, dom):
    """Per-batch fused stage-1 bias: BN1 bias + BN1-scaled global-feature term
    on the score half, zeros on the feature half.  Shape (B, 1, N1)."""
    B = global_feat.shape[0]
    n1 = dom["w1"].shape[1]
    gs = global_feat @ dom["w1_global"]                              # (B, 128)
    g = jnp.concatenate([gs, jnp.zeros((B, n1 - 128), gs.dtype)], axis=1)
    return (g + dom["b1"]).reshape(B, 1, n1)


def make_params(key):
    ks = jax.random.split(key, 9)
    params = {}
    pc_score = _make_mlp3_params(ks[0], [128 + 512, 128, 64, 1])
    img_score = _make_mlp3_params(ks[1], [64 + 512, 128, 64, 1])
    img_feat = _make_mlp3_params(ks[2], [64, 64, 64, 64])
    pc_feat = _make_mlp3_params(ks[3], [128, 128, 128, 64])

    params["img_dom"] = _prep_fused_domain(img_score, img_feat, 64)
    params["pc_dom"] = _prep_fused_domain(pc_score, pc_feat, 128)

    # backbone stubs
    params["img_proj"] = jax.random.normal(ks[4], (3, 64), jnp.float32) * 0.2
    params["img_glob"] = jax.random.normal(ks[5], (64, 512), jnp.float32) * 0.1
    params["pt_proj"] = jax.random.normal(ks[6], (7, 128), jnp.float32) * 0.2
    params["pt_glob"] = jax.random.normal(ks[7], (128, 512), jnp.float32) * 0.1
    params["vox_proj"] = jax.random.normal(ks[8], (11, 128), jnp.float32) * 0.1
    return params


# ----------------------------------------------------------------------------
# Backbone stubs (plain-JAX glue, deterministic, token-major for the kernel)
# ----------------------------------------------------------------------------
def stub_image_resnet(img, params):
    # TODO(synk): Image_ResNet backbone not defined in the reference; replaced
    # by 2x avg-pool + 1x1 projection producing the documented output shapes.
    B, C, H, W = img.shape
    x = img.reshape(B, C, H // 2, 2, W // 2, 2).mean(axis=(3, 5))    # (B,3,H/2,W/2)
    tok = x.transpose(0, 2, 3, 1).reshape(B, (H // 2) * (W // 2), C)
    f = jnp.tanh(tok @ params["img_proj"])                           # (B,T,64) token-major
    glob = jnp.tanh(f.mean(axis=1) @ params["img_glob"])             # (B,512)
    pix0 = f.reshape(B, H // 2, W // 2, 64).transpose(0, 3, 1, 2)    # (B,64,H/2,W/2)
    return glob, f, pix0


def stub_point_encoder(x7, params):
    # TODO(synk): PointsEncoder_pointwise not defined; per-point projection +
    # max-pool global feature.
    B, _, N = x7.shape
    tok = x7.transpose(0, 2, 1)                                      # (B,N,7)
    f = jnp.tanh(tok @ params["pt_proj"])                            # (B,N,128) token-major
    glob = jnp.tanh(f.max(axis=1) @ params["pt_glob"])               # (B,512)
    pw0 = f.transpose(0, 2, 1)                                       # (B,128,N)
    return glob, f, pw0


def stub_voxel_branch(input_voxel, coords, B, params):
    # TODO(synk): SPVCNN sparse voxel conv has no clean Pallas equivalent;
    # replaced by a dense per-point projection on (features, voxel coords).
    feat_in = jnp.concatenate([input_voxel, coords.astype(jnp.float32)], axis=-1)
    f = jnp.tanh(feat_in @ params["vox_proj"])                       # (B*N, 128)
    N = f.shape[0] // B
    return None, f.reshape(B, N, 128)                                # token-major


# ----------------------------------------------------------------------------
# Full forward (mirrors VP2PMatchNet.forward)
# ----------------------------------------------------------------------------
def vp2p_forward(params, pc, intensity, sn, img):
    B, _, N = pc.shape
    Hf, Wf = img.shape[2] // 2, img.shape[3] // 2

    inp = jnp.concatenate((pc, intensity, sn), axis=1)               # (B,7,N)
    global_img_feat, pixel_tok, pixel_feat_0 = stub_image_resnet(img, params)
    global_pc_feat, point_tok_0, point_feat_0 = stub_point_encoder(inp, params)

    # voxelization glue (matches torch code)
    input_voxel = inp.transpose(0, 2, 1).reshape(-1, 7)
    batch_inds = jnp.repeat(jnp.arange(B).reshape(-1, 1), N, axis=1).reshape(-1, 1)
    pc_t = pc.transpose(0, 2, 1)                                     # (B,N,3)
    coords = pc_t - jnp.min(pc_t, axis=1, keepdims=True)
    coords = jnp.round(coords.reshape(-1, 3) / 0.05)
    coords = jnp.concatenate((coords, batch_inds.astype(coords.dtype)), axis=-1)
    _, voxel_tok = stub_voxel_branch(input_voxel, coords, B, params)

    point_tok = point_tok_0 + voxel_tok                              # (B,N,128) token-major

    # Fold the 512-ch global features into per-batch biases of the score-head
    # first conv (tiny (B,512)@(512,128) matmuls) — no broadcast/concat in HBM.
    g_img = _stage1_bias(global_pc_feat, params["img_dom"])          # (B,1,192)
    g_pc = _stage1_bias(global_img_feat, params["pc_dom"])           # (B,1,256)

    # ---- Pallas hot path: one fused call per token domain ----
    pix_out = fused_heads_pallas(pixel_tok.astype(jnp.bfloat16), g_img,
                                 params["img_dom"])                  # (B,T,128) bf16
    pt_out = fused_heads_pallas(point_tok.astype(jnp.bfloat16), g_pc,
                                params["pc_dom"])                    # (B,N,128) bf16

    # TODO(synk): downstream consumers would ideally stay token-major; NCHW/NCL
    # transposes retained only to mirror the PyTorch return layout.
    pixel_wised_feat = pix_out[..., :64].astype(jnp.float32) \
        .reshape(B, Hf, Wf, 64).transpose(0, 3, 1, 2)                # (B,64,Hf,Wf)
    img_score = pix_out[..., 64:65].astype(jnp.float32) \
        .reshape(B, Hf, Wf, 1).transpose(0, 3, 1, 2)                 # (B,1,Hf,Wf)
    point_wised_feat = pt_out[..., :64].astype(jnp.float32).transpose(0, 2, 1)  # (B,64,N)
    pc_score = pt_out[..., 64:65].astype(jnp.float32).transpose(0, 2, 1)        # (B,1,N)

    return (pixel_wised_feat, point_wised_feat, img_score, pc_score,
            pixel_feat_0, point_feat_0)


# ----------------------------------------------------------------------------
if __name__ == "__main__":
    key = jax.random.PRNGKey(0)
    kp, k1, k2, k3, k4 = jax.random.split(key, 5)
    params = make_params(kp)

    B, N, H, W = 2, 128, 16, 16
    pc = jax.random.normal(k1, (B, 3, N), jnp.float32)
    intensity = jax.random.uniform(k2, (B, 1, N), jnp.float32)
    sn = jax.random.normal(k3, (B, 3, N), jnp.float32)
    img = jax.random.normal(k4, (B, 3, H, W), jnp.float32)

    outs = jax.jit(vp2p_forward)(params, pc, intensity, sn, img)
    outs = jax.block_until_ready(outs)

    pix_f, pt_f, img_s, pc_s, pix_f0, pt_f0 = outs
    assert pix_f.shape == (B, 64, H // 2, W // 2)
    assert pt_f.shape == (B, 64, N)
    assert img_s.shape == (B, 1, H // 2, W // 2)
    assert pc_s.shape == (B, 1, N)
    assert pix_f0.shape == (B, 64, H // 2, W // 2)
    assert pt_f0.shape == (B, 128, N)
    for t in (pix_f, pt_f, img_s, pc_s):
        assert bool(jnp.all(jnp.isfinite(t)))
    # scores are post-sigmoid, features are L2-normalized (bf16 tolerance)
    assert bool(jnp.all((img_s >= 0.0) & (img_s <= 1.0)))
    assert bool(jnp.all((pc_s >= 0.0) & (pc_s <= 1.0)))
    assert bool(jnp.all(jnp.linalg.norm(pt_f, axis=1) <= 1.05))
    assert bool(jnp.all(jnp.linalg.norm(pix_f, axis=1) <= 1.05))
    print("KERNEL_OK")
</pallas_src>

<mosaic_0001>
module attributes {stable_mosaic.version = 11 : i64} {
  func.func @_fused_domain_kernel(%arg0: i32, %arg1: i32, %arg2: memref<1x1x256xf32, #tpu.memory_space<vmem>>, %arg3: memref<1x128x128xbf16, #tpu.memory_space<vmem>>, %arg4: memref<128x256xbf16, #tpu.memory_space<vmem>>, %arg5: memref<256x192xbf16, #tpu.memory_space<vmem>>, %arg6: memref<1x192xf32, #tpu.memory_space<vmem>>, %arg7: memref<192x128xbf16, #tpu.memory_space<vmem>>, %arg8: memref<1x128x128xbf16, #tpu.memory_space<vmem>>) attributes {dimension_semantics = [#tpu.dimension_semantics<parallel>, #tpu.dimension_semantics<parallel>], iteration_bounds = array<i64: 2, 1>, scalar_prefetch = 0 : i64, scratch_operands = 0 : i64, tpu.core_type = #tpu.core_type<tc>, window_params = [{transform_indices = @transform_0, window_bounds = array<i64: 1, 1, 256>}, {transform_indices = @transform_1, window_bounds = array<i64: 1, 128, 128>}, {pipeline_mode = #tpu.pipeline_mode<synchronous>, transform_indices = @transform_2, window_bounds = array<i64: 128, 256>}, {pipeline_mode = #tpu.pipeline_mode<synchronous>, transform_indices = @transform_3, window_bounds = array<i64: 256, 192>}, {pipeline_mode = #tpu.pipeline_mode<synchronous>, transform_indices = @transform_4, window_bounds = array<i64: 1, 192>}, {pipeline_mode = #tpu.pipeline_mode<synchronous>, transform_indices = @transform_5, window_bounds = array<i64: 192, 128>}, {transform_indices = @transform_6, window_bounds = array<i64: 1, 128, 128>}]} {
    %c0 = arith.constant 0 : index
    %c0_0 = arith.constant 0 : index
    %c0_1 = arith.constant 0 : index
    %0 = vector.load %arg3[%c0, %c0_0, %c0_1] : memref<1x128x128xbf16, #tpu.memory_space<vmem>>, vector<1x128x128xbf16>
    %1 = vector.shape_cast %0 : vector<1x128x128xbf16> to vector<128x128xbf16>
    %c0_2 = arith.constant 0 : index
    %c0_3 = arith.constant 0 : index
    %c0_4 = arith.constant 0 : index
    %2 = vector.load %arg2[%c0_2, %c0_3, %c0_4] : memref<1x1x256xf32, #tpu.memory_space<vmem>>, vector<1x1x256xf32>
    %3 = vector.shape_cast %2 : vector<1x1x256xf32> to vector<1x256xf32>
    %c0_5 = arith.constant 0 : index
    %c0_6 = arith.constant 0 : index
    %4 = vector.load %arg4[%c0_5, %c0_6] : memref<128x256xbf16, #tpu.memory_space<vmem>>, vector<128x256xbf16>
    %cst = arith.constant dense<0.000000e+00> : vector<128x256xf32>
    %5 = tpu.matmul %1, %4, %cst {dimension_numbers = #tpu.dot_dimension_numbers<[1], [0], [0], [1], [0, 0, 1, 1], [], []>} : vector<128x128xbf16>, vector<128x256xbf16>, vector<128x256xf32> -> vector<128x256xf32>
    %6 = vector.broadcast %3 : vector<1x256xf32> to vector<128x256xf32>
    %7 = arith.addf %5, %6 : vector<128x256xf32>
    %cst_7 = arith.constant 0.000000e+00 : f32
    %8 = vector.broadcast %cst_7 : f32 to vector<128x256xf32>
    %9 = arith.maximumf %7, %8 : vector<128x256xf32>
    %10 = arith.truncf %9 : vector<128x256xf32> to vector<128x256xbf16>
    %c0_8 = arith.constant 0 : index
    %c0_9 = arith.constant 0 : index
    %11 = vector.load %arg5[%c0_8, %c0_9] : memref<256x192xbf16, #tpu.memory_space<vmem>>, vector<256x192xbf16>
    %cst_10 = arith.constant dense<0.000000e+00> : vector<128x192xf32>
    %12 = tpu.matmul %10, %11, %cst_10 {dimension_numbers = #tpu.dot_dimension_numbers<[1], [0], [0], [1], [0, 0, 1, 1], [], []>} : vector<128x256xbf16>, vector<256x192xbf16>, vector<128x192xf32> -> vector<128x192xf32>
    %c0_11 = arith.constant 0 : index
    %c0_12 = arith.constant 0 : index
    %13 = vector.load %arg6[%c0_11, %c0_12] : memref<1x192xf32, #tpu.memory_space<vmem>>, vector<1x192xf32>
    %14 = vector.broadcast %13 : vector<1x192xf32> to vector<128x192xf32>
    %15 = arith.addf %12, %14 : vector<128x192xf32>
    %cst_13 = arith.constant 0.000000e+00 : f32
    %16 = vector.broadcast %cst_13 : f32 to vector<128x192xf32>
    %17 = arith.maximumf %15, %16 : vector<128x192xf32>
    %18 = arith.truncf %17 : vector<128x192xf32> to vector<128x192xbf16>
    %c0_14 = arith.constant 0 : index
    %c0_15 = arith.constant 0 : index
    %19 = vector.load %arg7[%c0_14, %c0_15] : memref<192x128xbf16, #tpu.memory_space<vmem>>, vector<192x128xbf16>
    %cst_16 = arith.constant dense<0.000000e+00> : vector<128x128xf32>
    %20 = tpu.matmul %18, %19, %cst_16 {dimension_numbers = #tpu.dot_dimension_numbers<[1], [0], [0], [1], [0, 0, 1, 1], [], []>} : vector<128x192xbf16>, vector<192x128xbf16>, vector<128x128xf32> -> vector<128x128xf32>
    %21 = tpu.iota {dimensions = array<i32: 1>} : vector<128x128xi32>
    %c64_i32 = arith.constant 64 : i32
    %22 = vector.broadcast %c64_i32 : i32 to vector<128x128xi32>
    %23 = arith.cmpi slt, %21, %22 : vector<128x128xi32>
    %24 = arith.mulf %20, %20 : vector<128x128xf32>
    %cst_17 = arith.constant 0.000000e+00 : f32
    %25 = vector.broadcast %cst_17 : f32 to vector<128x128xf32>
    %26 = arith.select %23, %24, %25 : vector<128x128xi1>, vector<128x128xf32>
    %cst_18 = arith.constant dense<0.000000e+00> : vector<128xf32>
    %27 = vector.multi_reduction <add>, %26, %cst_18 [1] : vector<128x128xf32> to vector<128xf32>
    %28 = vector.shape_cast %27 : vector<128xf32> to vector<128x1xf32>
    %cst_19 = arith.constant 1.000000e-24 : f32
    %29 = vector.broadcast %cst_19 : f32 to vector<128x1xf32>
    %30 = arith.maximumf %28, %29 : vector<128x1xf32>
    %31 = math.rsqrt %30 : vector<128x1xf32>
    %32 = vector.broadcast %31 : vector<128x1xf32> to vector<128x128xf32>
    %33 = arith.mulf %20, %32 : vector<128x128xf32>
    %34 = arith.negf %20 : vector<128x128xf32>
    %35 = math.exp %34 : vector<128x128xf32>
    %cst_20 = arith.constant 1.000000e+00 : f32
    %36 = vector.broadcast %cst_20 : f32 to vector<128x128xf32>
    %37 = arith.addf %36, %35 : vector<128x128xf32>
    %38 = arith.divf %36, %37 : vector<128x128xf32>
    %39 = arith.select %23, %33, %38 : vector<128x128xi1>, vector<128x128xf32>
    %40 = arith.truncf %39 : vector<128x128xf32> to vector<128x128xbf16>
    %c0_21 = arith.constant 0 : index
    %c0_22 = arith.constant 0 : index
    %c0_23 = arith.constant 0 : index
    %41 = vector.load %arg8[%c0_21, %c0_22, %c0_23] : memref<1x128x128xbf16, #tpu.memory_space<vmem>>, vector<1x128x128xbf16>
    %42 = vector.shape_cast %41 : vector<1x128x128xbf16> to vector<128x128xbf16>
    %43 = vector.shape_cast %40 : vector<128x128xbf16> to vector<1x128x128xbf16>
    tpu.vector_store %arg8[%c0_21, %c0_22, %c0_23], %43 {strides = array<i32>} : memref<1x128x128xbf16, #tpu.memory_space<vmem>>, vector<1x128x128xbf16>,
    return
  }
  func.func @transform_0(%arg0: i32, %arg1: i32) -> (i32, i32, i32) {
    %c0_i32 = arith.constant 0 : i32
    %c0_i32_0 = arith.constant 0 : i32
    %c0_i32_1 = arith.constant 0 : i32
    return %arg0, %c0_i32, %c0_i32_0 : i32, i32, i32
  }
  func.func @transform_1(%arg0: i32, %arg1: i32) -> (i32, i32, i32) {
    %c0_i32 = arith.constant 0 : i32
    %c0_i32_0 = arith.constant 0 : i32
    return %arg0, %arg1, %c0_i32 : i32, i32, i32
  }
  func.func @transform_2(%arg0: i32, %arg1: i32) -> (i32, i32) {
    %c0_i32 = arith.constant 0 : i32
    %c0_i32_0 = arith.constant 0 : i32
    %c0_i32_1 = arith.constant 0 : i32
    return %c0_i32, %c0_i32_0 : i32, i32
  }
  func.func @transform_3(%arg0: i32, %arg1: i32) -> (i32, i32) {
    %c0_i32 = arith.constant 0 : i32
    %c0_i32_0 = arith.constant 0 : i32
    %c0_i32_1 = arith.constant 0 : i32
    return %c0_i32, %c0_i32_0 : i32, i32
  }
  func.func @transform_4(%arg0: i32, %arg1: i32) -> (i32, i32) {
    %c0_i32 = arith.constant 0 : i32
    %c0_i32_0 = arith.constant 0 : i32
    %c0_i32_1 = arith.constant 0 : i32
    return %c0_i32, %c0_i32_0 : i32, i32
  }
  func.func @transform_5(%arg0: i32, %arg1: i32) -> (i32, i32) {
    %c0_i32 = arith.constant 0 : i32
    %c0_i32_0 = arith.constant 0 : i32
    %c0_i32_1 = arith.constant 0 : i32
    return %c0_i32, %c0_i32_0 : i32, i32
  }
  func.func @transform_6(%arg0: i32, %arg1: i32) -> (i32, i32, i32) {
    %c0_i32 = arith.constant 0 : i32
    %c0_i32_0 = arith.constant 0 : i32
    return %arg0, %arg1, %c0_i32 : i32, i32, i32
  }
}

module attributes {stable_mosaic.version = 11 : i64} {
  func.func @_fused_domain_kernel(%arg0: i32, %arg1: i32, %arg2: memref<1x1x192xf32, #tpu.memory_space<vmem>>, %arg3: memref<1x64x64xbf16, #tpu.memory_space<vmem>>, %arg4: memref<64x192xbf16, #tpu.memory_space<vmem>>, %arg5: memref<192x128xbf16, #tpu.memory_space<vmem>>, %arg6: memref<1x128xf32, #tpu.memory_space<vmem>>, %arg7: memref<128x128xbf16, #tpu.memory_space<vmem>>, %arg8: memref<1x64x128xbf16, #tpu.memory_space<vmem>>) attributes {dimension_semantics = [#tpu.dimension_semantics<parallel>, #tpu.dimension_semantics<parallel>], iteration_bounds = array<i64: 2, 1>, scalar_prefetch = 0 : i64, scratch_operands = 0 : i64, tpu.core_type = #tpu.core_type<tc>, window_params = [{transform_indices = @transform_0, window_bounds = array<i64: 1, 1, 192>}, {transform_indices = @transform_1, window_bounds = array<i64: 1, 64, 64>}, {pipeline_mode = #tpu.pipeline_mode<synchronous>, transform_indices = @transform_2, window_bounds = array<i64: 64, 192>}, {pipeline_mode = #tpu.pipeline_mode<synchronous>, transform_indices = @transform_3, window_bounds = array<i64: 192, 128>}, {pipeline_mode = #tpu.pipeline_mode<synchronous>, transform_indices = @transform_4, window_bounds = array<i64: 1, 128>}, {pipeline_mode = #tpu.pipeline_mode<synchronous>, transform_indices = @transform_5, window_bounds = array<i64: 128, 128>}, {transform_indices = @transform_6, window_bounds = array<i64: 1, 64, 128>}]} {
    %c0 = arith.constant 0 : index
    %c0_0 = arith.constant 0 : index
    %c0_1 = arith.constant 0 : index
    %0 = vector.load %arg3[%c0, %c0_0, %c0_1] : memref<1x64x64xbf16, #tpu.memory_space<vmem>>, vector<1x64x64xbf16>
    %1 = vector.shape_cast %0 : vector<1x64x64xbf16> to vector<64x64xbf16>
    %c0_2 = arith.constant 0 : index
    %c0_3 = arith.constant 0 : index
    %c0_4 = arith.constant 0 : index
    %2 = vector.load %arg2[%c0_2, %c0_3, %c0_4] : memref<1x1x192xf32, #tpu.memory_space<vmem>>, vector<1x1x192xf32>
    %3 = vector.shape_cast %2 : vector<1x1x192xf32> to vector<1x192xf32>
    %c0_5 = arith.constant 0 : index
    %c0_6 = arith.constant 0 : index
    %4 = vector.load %arg4[%c0_5, %c0_6] : memref<64x192xbf16, #tpu.memory_space<vmem>>, vector<64x192xbf16>
    %cst = arith.constant dense<0.000000e+00> : vector<64x192xf32>
    %5 = tpu.matmul %1, %4, %cst {dimension_numbers = #tpu.dot_dimension_numbers<[1], [0], [0], [1], [0, 0, 1, 1], [], []>} : vector<64x64xbf16>, vector<64x192xbf16>, vector<64x192xf32> -> vector<64x192xf32>
    %6 = vector.broadcast %3 : vector<1x192xf32> to vector<64x192xf32>
    %7 = arith.addf %5, %6 : vector<64x192xf32>
    %cst_7 = arith.constant 0.000000e+00 : f32
    %8 = vector.broadcast %cst_7 : f32 to vector<64x192xf32>
    %9 = arith.maximumf %7, %8 : vector<64x192xf32>
    %10 = arith.truncf %9 : vector<64x192xf32> to vector<64x192xbf16>
    %c0_8 = arith.constant 0 : index
    %c0_9 = arith.constant 0 : index
    %11 = vector.load %arg5[%c0_8, %c0_9] : memref<192x128xbf16, #tpu.memory_space<vmem>>, vector<192x128xbf16>
    %cst_10 = arith.constant dense<0.000000e+00> : vector<64x128xf32>
    %12 = tpu.matmul %10, %11, %cst_10 {dimension_numbers = #tpu.dot_dimension_numbers<[1], [0], [0], [1], [0, 0, 1, 1], [], []>} : vector<64x192xbf16>, vector<192x128xbf16>, vector<64x128xf32> -> vector<64x128xf32>
    %c0_11 = arith.constant 0 : index
    %c0_12 = arith.constant 0 : index
    %13 = vector.load %arg6[%c0_11, %c0_12] : memref<1x128xf32, #tpu.memory_space<vmem>>, vector<1x128xf32>
    %14 = vector.broadcast %13 : vector<1x128xf32> to vector<64x128xf32>
    %15 = arith.addf %12, %14 : vector<64x128xf32>
    %cst_13 = arith.constant 0.000000e+00 : f32
    %16 = vector.broadcast %cst_13 : f32 to vector<64x128xf32>
    %17 = arith.maximumf %15, %16 : vector<64x128xf32>
    %18 = arith.truncf %17 : vector<64x128xf32> to vector<64x128xbf16>
    %c0_14 = arith.constant 0 : index
    %c0_15 = arith.constant 0 : index
    %19 = vector.load %arg7[%c0_14, %c0_15] : memref<128x128xbf16, #tpu.memory_space<vmem>>, vector<128x128xbf16>
    %cst_16 = arith.constant dense<0.000000e+00> : vector<64x128xf32>
    %20 = tpu.matmul %18, %19, %cst_16 {dimension_numbers = #tpu.dot_dimension_numbers<[1], [0], [0], [1], [0, 0, 1, 1], [], []>} : vector<64x128xbf16>, vector<128x128xbf16>, vector<64x128xf32> -> vector<64x128xf32>
    %21 = tpu.iota {dimensions = array<i32: 1>} : vector<64x128xi32>
    %c64_i32 = arith.constant 64 : i32
    %22 = vector.broadcast %c64_i32 : i32 to vector<64x128xi32>
    %23 = arith.cmpi slt, %21, %22 : vector<64x128xi32>
    %24 = arith.mulf %20, %20 : vector<64x128xf32>
    %cst_17 = arith.constant 0.000000e+00 : f32
    %25 = vector.broadcast %cst_17 : f32 to vector<64x128xf32>
    %26 = arith.select %23, %24, %25 : vector<64x128xi1>, vector<64x128xf32>
    %cst_18 = arith.constant dense<0.000000e+00> : vector<64xf32>
    %27 = vector.multi_reduction <add>, %26, %cst_18 [1] : vector<64x128xf32> to vector<64xf32>
    %28 = vector.shape_cast %27 : vector<64xf32> to vector<64x1xf32>
    %cst_19 = arith.constant 1.000000e-24 : f32
    %29 = vector.broadcast %cst_19 : f32 to vector<64x1xf32>
    %30 = arith.maximumf %28, %29 : vector<64x1xf32>
    %31 = math.rsqrt %30 : vector<64x1xf32>
    %32 = vector.broadcast %31 : vector<64x1xf32> to vector<64x128xf32>
    %33 = arith.mulf %20, %32 : vector<64x128xf32>
    %34 = arith.negf %20 : vector<64x128xf32>
    %35 = math.exp %34 : vector<64x128xf32>
    %cst_20 = arith.constant 1.000000e+00 : f32
    %36 = vector.broadcast %cst_20 : f32 to vector<64x128xf32>
    %37 = arith.addf %36, %35 : vector<64x128xf32>
    %38 = arith.divf %36, %37 : vector<64x128xf32>
    %39 = arith.select %23, %33, %38 : vector<64x128xi1>, vector<64x128xf32>
    %40 = arith.truncf %39 : vector<64x128xf32> to vector<64x128xbf16>
    %c0_21 = arith.constant 0 : index
    %c0_22 = arith.constant 0 : index
    %c0_23 = arith.constant 0 : index
    %41 = vector.load %arg8[%c0_21, %c0_22, %c0_23] : memref<1x64x128xbf16, #tpu.memory_space<vmem>>, vector<1x64x128xbf16>
    %42 = vector.shape_cast %41 : vector<1x64x128xbf16> to vector<64x128xbf16>
    %43 = vector.shape_cast %40 : vector<64x128xbf16> to vector<1x64x128xbf16>
    tpu.vector_store %arg8[%c0_21, %c0_22, %c0_23], %43 {strides = array<i32>} : memref<1x64x128xbf16, #tpu.memory_space<vmem>>, vector<1x64x128xbf16>,
    return
  }
  func.func @transform_0(%arg0: i32, %arg1: i32) -> (i32, i32, i32) {
    %c0_i32 = arith.constant 0 : i32
    %c0_i32_0 = arith.constant 0 : i32
    %c0_i32_1 = arith.constant 0 : i32
    return %arg0, %c0_i32, %c0_i32_0 : i32, i32, i32
  }
  func.func @transform_1(%arg0: i32, %arg1: i32) -> (i32, i32, i32) {
    %c0_i32 = arith.constant 0 : i32
    %c0_i32_0 = arith.constant 0 : i32
    return %arg0, %arg1, %c0_i32 : i32, i32, i32
  }
  func.func @transform_2(%arg0: i32, %arg1: i32) -> (i32, i32) {
    %c0_i32 = arith.constant 0 : i32
    %c0_i32_0 = arith.constant 0 : i32
    %c0_i32_1 = arith.constant 0 : i32
    return %c0_i32, %c0_i32_0 : i32, i32
  }
  func.func @transform_3(%arg0: i32, %arg1: i32) -> (i32, i32) {
    %c0_i32 = arith.constant 0 : i32
    %c0_i32_0 = arith.constant 0 : i32
    %c0_i32_1 = arith.constant 0 : i32
    return %c0_i32, %c0_i32_0 : i32, i32
  }
  func.func @transform_4(%arg0: i32, %arg1: i32) -> (i32, i32) {
    %c0_i32 = arith.constant 0 : i32
    %c0_i32_0 = arith.constant 0 : i32
    %c0_i32_1 = arith.constant 0 : i32
    return %c0_i32, %c0_i32_0 : i32, i32
  }
  func.func @transform_5(%arg0: i32, %arg1: i32) -> (i32, i32) {
    %c0_i32 = arith.constant 0 : i32
    %c0_i32_0 = arith.constant 0 : i32
    %c0_i32_1 = arith.constant 0 : i32
    return %c0_i32, %c0_i32_0 : i32, i32
  }
  func.func @transform_6(%arg0: i32, %arg1: i32) -> (i32, i32, i32) {
    %c0_i32 = arith.constant 0 : i32
    %c0_i32_0 = arith.constant 0 : i32
    return %arg0, %arg1, %c0_i32 : i32, i32, i32
  }
}

</mosaic_0001>

<llo_original>
// kernel: vp2p_forward.2
$region0: #{vp2p_forward.2}
  #allocation0 [shape = 'u32[]', space=smem, size = 0x4, offset = 0x4, fixed_abs, tag = 'smem constant byte address 0x4 - core index']
  #allocation1 [shape = 'u32[72,128]{1,0:T(1,128)}', space=vmem, size = 0x9000, scoped, tag = 'internal scratch']
  %s0 = inlined_call_operand.vmem [shape: f32[2,1,192], index: 0, kind: input, shape index: {}]
  %s1 = inlined_call_operand.vmem [shape: bf16[2,64,64], index: 1, kind: input, shape index: {}]
  %s2 = inlined_call_operand.vmem [shape: bf16[64,192], index: 2, kind: input, shape index: {}]
  %s3 = inlined_call_operand.vmem [shape: bf16[192,128], index: 3, kind: input, shape index: {}]
  %s4 = inlined_call_operand.vmem [shape: f32[1,128], index: 4, kind: input, shape index: {}]
  %s5 = inlined_call_operand.vmem [shape: bf16[128,128], index: 5, kind: input, shape index: {}]
  %s6 = inlined_call_operand.vmem [shape: bf16[2,64,128], index: 6, kind: output, shape index: {}]
  %s7 = sld [smem:[#allocation0]]
  $region57: #{vp2p_forward.2} parent=0
    _
  %s9 = ssub.s32 1, %s7
  %s10 = scalar_select 0, %s9, %s7
  loop: start=0, step=1, limit=4
  $region2: #{vp2p_forward.2} parent=0 // loop_pre_header
    _
  $region3: #{vp2p_forward.2} parent=0 // loop_header
    %s12 = sphi 0, %s16
    %p13 = scmp.ge.s32.totalorder %s12, 4
    %s19 = sphi 0, %s31
    %s20 = sphi 0, %s27
    %s21 = sphi 0, %s19
    %s22 = sphi 0, %s20
    %s23 = sphi 0, %s21
    %s24 = sphi 0, %s22
    %s34 = sphi 0, %s36
    %s37 = sphi 0, %s34
    %s38 = sphi 0, %s37
    %s54 = sphi 0, %s38
    %s62 = sphi 0, %s64
    %s65 = sphi 0, %s62
    %s66 = sphi 0, %s65
    %s82 = sphi 0, %s66
    %s86 = sphi 0, %s86
    %s88 = sphi 0, %s86
    %s89 = sphi 0, %s88
    %s103 = sphi 0, %s89
    %s107 = sphi 0, %s107
    %s109 = sphi 0, %s107
    %s110 = sphi 0, %s109
    %s124 = sphi 0, %s110
    %s128 = sphi 0, %s128
    %s130 = sphi 0, %s128
    %s131 = sphi 0, %s130
    %s145 = sphi 0, %s131
    %s149 = sphi 0, %s149
    %s151 = sphi 0, %s149
    %s152 = sphi 0, %s151
    %s166 = sphi 0, %s152
    %s174 = sphi 0, %s176
    %s177 = sphi 0, %s174
    %s178 = sphi 0, %s177
    %s194 = sphi 0, %s178
  $region4: #{vp2p_forward.2} parent=0 // loop_header_branch
    %15 = sbr.rel (%p13) target = $region8
  $region5: #{vp2p_forward.2} parent=0 // loop_body
    %s17 = ssub.s32 %s12, 1
    %s18 = ssub.s32 %s12, 2
    %s25 = sadd.s32 1, %s20
    %p26 = scmp.ge.s32.totalorder %s25, 1
    %s27 = scalar_select %p26, 0, %s25
    %s28 = sadd.s32 1, %s19
    %s29 = scalar_select %p26, %s28, %s19
    %p30 = scmp.ge.s32.totalorder %s29, 2
    %s31 = scalar_select %p30, 0, %s29
    %s32 = ssub.s32 %s19, %s31
    %p33 = scmp.eq.s32.totalorder %s32, 0
    %s35 = sadd.s32 %s34, 1
    %s36 = scalar_select %p33, %s34, %s35
    %p39 = pneg %p33
    %p40 = scmp.eq.s32.totalorder %s12, 1
    %p41 = por %p39, %p40
    %p42 = scmp.ne.s32.totalorder %s34, %s37
    %p43 = scmp.eq.s32.totalorder %s12, 0
    %p44 = por %p42, %p43
    %p45 = scmp.ne.s32.totalorder %s34, %s37
    %p46 = scmp.eq.s32.totalorder %s17, 1
    %p47 = por %p45, %p46
    %p48 = scmp.ne.s32.totalorder %s37, %s38
    %p49 = scmp.eq.s32.totalorder %s17, 0
    %p50 = por %p48, %p49
    %p51 = scmp.ne.s32.totalorder %s37, %s38
    %p52 = scmp.eq.s32.totalorder %s18, 1
    %p53 = por %p51, %p52
    %p55 = scmp.ne.s32.totalorder %s38, %s54
    %p56 = scmp.eq.s32.totalorder %s18, 0
    %p57 = por %p55, %p56
    %s58 = ssub.s32 %s19, %s31
    %s59 = ssub.s32 %s20, %s27
    %s60 = sor.u32 %s58, %s59
    %p61 = scmp.eq.s32.totalorder %s60, 0
    %s63 = sadd.s32 %s62, 1
    %s64 = scalar_select %p61, %s62, %s63
    %p67 = pneg %p61
    %p68 = scmp.eq.s32.totalorder %s12, 1
    %p69 = por %p67, %p68
    %p70 = scmp.ne.s32.totalorder %s62, %s65
    %p71 = scmp.eq.s32.totalorder %s12, 0
    %p72 = por %p70, %p71
    %p73 = scmp.ne.s32.totalorder %s62, %s65
    %p74 = scmp.eq.s32.totalorder %s17, 1
    %p75 = por %p73, %p74
    %p76 = scmp.ne.s32.totalorder %s65, %s66
    %p77 = scmp.eq.s32.totalorder %s17, 0
    %p78 = por %p76, %p77
    %p79 = scmp.ne.s32.totalorder %s65, %s66
    %p80 = scmp.eq.s32.totalorder %s18, 1
    %p81 = por %p79, %p80
    %p83 = scmp.ne.s32.totalorder %s66, %s82
    %p84 = scmp.eq.s32.totalorder %s18, 0
    %p85 = por %p83, %p84
    %s87 = sadd.s32 %s86, 1
    %p90 = scmp.eq.s32.totalorder %s12, 1
    %p91 = scmp.ne.s32.totalorder %s86, %s88
    %p92 = scmp.eq.s32.totalorder %s12, 0
    %p93 = por %p91, %p92
    %p94 = scmp.ne.s32.totalorder %s86, %s88
    %p95 = scmp.eq.s32.totalorder %s17, 1
    %p96 = por %p94, %p95
    %p97 = scmp.ne.s32.totalorder %s88, %s89
    %p98 = scmp.eq.s32.totalorder %s17, 0
    %p99 = por %p97, %p98
    %p100 = scmp.ne.s32.totalorder %s88, %s89
    %p101 = scmp.eq.s32.totalorder %s18, 1
    %p102 = por %p100, %p101
    %p104 = scmp.ne.s32.totalorder %s89, %s103
    %p105 = scmp.eq.s32.totalorder %s18, 0
    %p106 = por %p104, %p105
    %s108 = sadd.s32 %s107, 1
    %p111 = scmp.eq.s32.totalorder %s12, 1
    %p112 = scmp.ne.s32.totalorder %s107, %s109
    %p113 = scmp.eq.s32.totalorder %s12, 0
    %p114 = por %p112, %p113
    %p115 = scmp.ne.s32.totalorder %s107, %s109
    %p116 = scmp.eq.s32.totalorder %s17, 1
    %p117 = por %p115, %p116
    %p118 = scmp.ne.s32.totalorder %s109, %s110
    %p119 = scmp.eq.s32.totalorder %s17, 0
    %p120 = por %p118, %p119
    %p121 = scmp.ne.s32.totalorder %s109, %s110
    %p122 = scmp.eq.s32.totalorder %s18, 1
    %p123 = por %p121, %p122
    %p125 = scmp.ne.s32.totalorder %s110, %s124
    %p126 = scmp.eq.s32.totalorder %s18, 0
    %p127 = por %p125, %p126
    %s129 = sadd.s32 %s128, 1
    %p132 = scmp.eq.s32.totalorder %s12, 1
    %p133 = scmp.ne.s32.totalorder %s128, %s130
    %p134 = scmp.eq.s32.totalorder %s12, 0
    %p135 = por %p133, %p134
    %p136 = scmp.ne.s32.totalorder %s128, %s130
    %p137 = scmp.eq.s32.totalorder %s17, 1
    %p138 = por %p136, %p137
    %p139 = scmp.ne.s32.totalorder %s130, %s131
    %p140 = scmp.eq.s32.totalorder %s17, 0
    %p141 = por %p139, %p140
    %p142 = scmp.ne.s32.totalorder %s130, %s131
    %p143 = scmp.eq.s32.totalorder %s18, 1
    %p144 = por %p142, %p143
    %p146 = scmp.ne.s32.totalorder %s131, %s145
    %p147 = scmp.eq.s32.totalorder %s18, 0
    %p148 = por %p146, %p147
    %s150 = sadd.s32 %s149, 1
    %p153 = scmp.eq.s32.totalorder %s12, 1
    %p154 = scmp.ne.s32.totalorder %s149, %s151
    %p155 = scmp.eq.s32.totalorder %s12, 0
    %p156 = por %p154, %p155
    %p157 = scmp.ne.s32.totalorder %s149, %s151
    %p158 = scmp.eq.s32.totalorder %s17, 1
    %p159 = por %p157, %p158
    %p160 = scmp.ne.s32.totalorder %s151, %s152
    %p161 = scmp.eq.s32.totalorder %s17, 0
    %p162 = por %p160, %p161
    %p163 = scmp.ne.s32.totalorder %s151, %s152
    %p164 = scmp.eq.s32.totalorder %s18, 1
    %p165 = por %p163, %p164
    %p167 = scmp.ne.s32.totalorder %s152, %s166
    %p168 = scmp.eq.s32.totalorder %s18, 0
    %p169 = por %p167, %p168
    %s170 = ssub.s32 %s19, %s31
    %s171 = ssub.s32 %s20, %s27
    %s172 = sor.u32 %s170, %s171
    %p173 = scmp.eq.s32.totalorder %s172, 0
    %s175 = sadd.s32 %s174, 1
    %s176 = scalar_select %p173, %s174, %s175
    %p179 = pneg %p173
    %p180 = scmp.eq.s32.totalorder %s12, 1
    %p181 = por %p179, %p180
    %p182 = scmp.ne.s32.totalorder %s174, %s177
    %p183 = scmp.eq.s32.totalorder %s12, 0
    %p184 = por %p182, %p183
    %p185 = scmp.ne.s32.totalorder %s174, %s177
    %p186 = scmp.eq.s32.totalorder %s17, 1
    %p187 = por %p185, %p186
    %p188 = scmp.ne.s32.totalorder %s177, %s178
    %p189 = scmp.eq.s32.totalorder %s17, 0
    %p190 = por %p188, %p189
    %p191 = scmp.ne.s32.totalorder %s177, %s178
    %p192 = scmp.eq.s32.totalorder %s18, 1
    %p193 = por %p191, %p192
    %p195 = scmp.ne.s32.totalorder %s178, %s194
    %p196 = scmp.eq.s32.totalorder %s18, 0
    %p197 = por %p195, %p196
    %p198 = scmp.le.s32.totalorder 1, %s12
    %p199 = scmp.lt.s32.totalorder %s12, 3
    %p200 = pnand %p198, %p199
    %p201 = pneg %p200
    // Predicated region
    $region9: #{vp2p_forward.2} parent=5 // pred_check
      _
    $region10: #{vp2p_forward.2} parent=5 // pred_check_branch
      %203 = sbr.rel (%p200) target = $region12
    $region11: #{vp2p_forward.2} parent=5 // pred_region
      %s204 = ssub.s32 %s12, 1
      // Predicated region
      $region13: #{vp2p_forward.2} parent=11 // pred_check
        %p205 = pneg %p99
      $region14: #{vp2p_forward.2} parent=11 // pred_check_branch
        %207 = sbr.rel (%p205) target = $region16
      $region15: #{vp2p_forward.2} parent=11 // pred_region
        _
      $region16: #{vp2p_forward.2} parent=11 // pred_fallthru
        _
      // Predicated region
      $region17: #{vp2p_forward.2} parent=11 // pred_check
        %p208 = pneg %p120
      $region18: #{vp2p_forward.2} parent=11 // pred_check_branch
        %210 = sbr.rel (%p208) target = $region20
      $region19: #{vp2p_forward.2} parent=11 // pred_region
        _
      $region20: #{vp2p_forward.2} parent=11 // pred_fallthru
        _
      // Predicated region
      $region21: #{vp2p_forward.2} parent=11 // pred_check
        %p211 = pneg %p141
      $region22: #{vp2p_forward.2} parent=11 // pred_check_branch
        %213 = sbr.rel (%p211) target = $region24
      $region23: #{vp2p_forward.2} parent=11 // pred_region
        _
      $region24: #{vp2p_forward.2} parent=11 // pred_fallthru
        _
      // Predicated region
      $region25: #{vp2p_forward.2} parent=11 // pred_check
        %p214 = pneg %p162
      $region26: #{vp2p_forward.2} parent=11 // pred_check_branch
        %216 = sbr.rel (%p214) target = $region28
      $region27: #{vp2p_forward.2} parent=11 // pred_region
        _
      $region28: #{vp2p_forward.2} parent=11 // pred_fallthru
        _
    $region12: #{vp2p_forward.2} parent=5 // pred_fallthru
      _
    %p217 = scmp.lt.s32.totalorder %s12, 2
    // Predicated region
    $region29: #{vp2p_forward.2} parent=5 // pred_check
      %p218 = pneg %p217
    $region30: #{vp2p_forward.2} parent=5 // pred_check_branch
      %220 = sbr.rel (%p218) target = $region32
    $region31: #{vp2p_forward.2} parent=5 // pred_region
      // Predicated region
      $region33: #{vp2p_forward.2} parent=31 // pred_check
        %p221 = pneg %p44
      $region34: #{vp2p_forward.2} parent=31 // pred_check_branch
        %223 = sbr.rel (%p221) target = $region36
      $region35: #{vp2p_forward.2} parent=31 // pred_region
        %p224 = scmp.lt.s32.totalorder %s19, 1
        %s225 = scalar_select %p224, %s19, 1
        %s226 = smul.addr %s225, 2
        %s227 = scalar_lea.vmem %s0, %s226
      $region36: #{vp2p_forward.2} parent=31 // pred_fallthru
        _
      // Predicated region
      $region37: #{vp2p_forward.2} parent=31 // pred_check
        %p228 = pneg %p72
      $region38: #{vp2p_forward.2} parent=31 // pred_check_branch
        %230 = sbr.rel (%p228) target = $region40
      $region39: #{vp2p_forward.2} parent=31 // pred_region
        %s231 = smul.u32 8, %s20
        %p232 = scmp.lt.s32.totalorder %s19, 1
        %s233 = scalar_select %p232, %s19, 1
        %p234 = scmp.lt.s32.totalorder %s231, 7
        %s235 = scalar_select %p234, %s231, 7
        %s236 = smul.addr %s233, 8
        %s237 = sadd.s32 %s235, %s236
        %s238 = smul.addr %s237, 4
        %s239 = scalar_lea.vmem %s1, %s238
        %s240 = smul.u32 8, %s20
      $region40: #{vp2p_forward.2} parent=31 // pred_fallthru
        _
    $region32: #{vp2p_forward.2} parent=5 // pred_fallthru
      _
    %p241 = scmp.le.s32.totalorder 1, %s12
    %p242 = scmp.lt.s32.totalorder %s12, 3
    %p243 = pnand %p241, %p242
    %p244 = pneg %p243
    // Predicated region
    $region41: #{vp2p_forward.2} parent=5 // pred_check
      _
    $region42: #{vp2p_forward.2} parent=5 // pred_check_branch
      %246 = sbr.rel (%p243) target = $region44
    $region43: #{vp2p_forward.2} parent=5 // pred_region
      %s247 = ssub.s32 %s12, 1
      %p248 = scmp.lt.s32.totalorder %s21, 1
      %s249 = scalar_select %p248, %s21, 1
      %s250 = smul.addr %s249, 2
      %s251 = scalar_lea.vmem %s0, %s250
      %p252 = pneg %p50
      %p253 = pneg %p47
      %s254 = smul.u32 8, %s22
      %p255 = scmp.lt.s32.totalorder %s21, 1
      %s256 = scalar_select %p255, %s21, 1
      %p257 = scmp.lt.s32.totalorder %s254, 7
      %s258 = scalar_select %p257, %s254, 7
      %s259 = smul.addr %s256, 8
      %s260 = sadd.s32 %s258, %s259
      %s261 = smul.addr %s260, 4
      %s262 = scalar_lea.vmem %s1, %s261
      %p263 = pneg %p78
      %p264 = pneg %p75
      %p265 = pneg %p99
      %p266 = pneg %p96
      %p267 = pneg %p120
      %p268 = pneg %p117
      %p269 = pneg %p141
      %p270 = pneg %p138
      %p271 = pneg %p162
      %p272 = pneg %p159
      %p273 = pneg %p190
      %p274 = pneg %p187
      %s275 = smul.u32 8, %s22
      %p276 = scmp.lt.s32.totalorder %s21, 1
      %s277 = scalar_select %p276, %s21, 1
      %p278 = scmp.lt.s32.totalorder %s275, 7
      %s279 = scalar_select %p278, %s275, 7
      %s280 = smul.addr %s277, 8
      %s281 = sadd.s32 %s279, %s280
      %s282 = smul.addr %s281, 4
      %s283 = scalar_lea.vmem %s6, %s282
      %p284 = scmp.lt.s32.totalorder %s21, 1
      %s285 = scalar_select %p284, %s21, 1
      %s286 = smul.addr %s285, 2
      %s287 = scalar_lea.vmem %s0, %s286
      %s288 = smul.u32 8, %s22
      %p289 = scmp.lt.s32.totalorder %s21, 1
      %s290 = scalar_select %p289, %s21, 1
      %p291 = scmp.lt.s32.totalorder %s288, 7
      %s292 = scalar_select %p291, %s288, 7
      %s293 = smul.addr %s290, 8
      %s294 = sadd.s32 %s292, %s293
      %s295 = smul.addr %s294, 4
      %s296 = scalar_lea.vmem %s1, %s295
      %s297 = smul.u32 8, %s22
      %s298 = smul.u32 8, %s22
      %p299 = scmp.lt.s32.totalorder %s21, 1
      %s300 = scalar_select %p299, %s21, 1
      %p301 = scmp.lt.s32.totalorder %s298, 7
      %s302 = scalar_select %p301, %s298, 7
      %s303 = smul.addr %s300, 8
      %s304 = sadd.s32 %s302, %s303
      %s305 = smul.addr %s304, 4
      %s306 = scalar_lea.vmem %s6, %s305
      %s307 = smul.u32 8, %s22
      %v309 = vld [vmem:[%s296] sm:$0xf]
      %v310 = vld [vmem:[%s296 + $0x4] sm:$0xf]
      %v311 = vld [vmem:[%s296 + $0x8] sm:$0xf]
      %v312 = vld [vmem:[%s296 + $0xc] sm:$0xf]
      %v313 = vld [vmem:[%s296 + $0x10] sm:$0xf]
      %v314 = vld [vmem:[%s296 + $0x14] sm:$0xf]
      %v315 = vld [vmem:[%s296 + $0x18] sm:$0xf]
      %v316 = vld [vmem:[%s296 + $0x1c] sm:$0xf]
      %v317 = vld [vmem:[%s287] sm:$0x3]
      %v318 = vld [vmem:[%s2] sm:$0xff]
      %v319 = vld [vmem:[%s2 + $0x8] sm:$0xff]
      %v320 = vld [vmem:[%s2 + $0x10] sm:$0xff]
      %v321 = vld [vmem:[%s2 + $0x18] sm:$0xff]
      %v322 = vld [vmem:[%s2 + $0x20] sm:$0xff]
      %v323 = vld [vmem:[%s2 + $0x28] sm:$0xff]
      %v324 = vld [vmem:[%s2 + $0x30] sm:$0xff]
      %v325 = vld [vmem:[%s2 + $0x38] sm:$0xff]
      %v327 = vperm.slane %v317, 0
      %v328 = vperm.slane %v317, 1
      %v339 = vunpack.c.l.b16 %v309
      %v340 = vunpack.c.l.b16 %v310
      %v341 = vunpack.c.l.b16 %v311
      %v342 = vunpack.c.l.b16 %v312
      %v343 = vunpack.c.l.b16 %v313
      %v344 = vunpack.c.l.b16 %v314
      %v345 = vunpack.c.l.b16 %v315
      %v346 = vunpack.c.l.b16 %v316
      %v347 = vpack.c.b16 %v340, %v339
      %v348 = vpack.c.b16 %v342, %v341
      %v349 = vpack.c.b16 %v344, %v343
      %v350 = vpack.c.b16 %v346, %v345
      %v359 = vunpack.c.l.b16 %v318
      %v360 = vunpack.c.h.b16 %v318
      %v361 = vunpack.c.l.b16 %v319
      %v362 = vunpack.c.h.b16 %v319
      %v363 = vunpack.c.l.b16 %v320
      %v364 = vunpack.c.h.b16 %v320
      %v365 = vunpack.c.l.b16 %v321
      %v366 = vunpack.c.h.b16 %v321
      %v367 = vunpack.c.l.b16 %v322
      %v368 = vunpack.c.h.b16 %v322
      %v369 = vunpack.c.l.b16 %v323
      %v370 = vunpack.c.h.b16 %v323
      %v371 = vunpack.c.l.b16 %v324
      %v372 = vunpack.c.h.b16 %v324
      %v373 = vunpack.c.l.b16 %v325
      %v374 = vunpack.c.h.b16 %v325
      %v375 = vpack.c.b16 %v361, %v359
      %v376 = vpack.c.b16 %v362, %v360
      %v377 = vpack.c.b16 %v365, %v363
      %v378 = vpack.c.b16 %v366, %v364
      %v379 = vpack.c.b16 %v369, %v367
      %v380 = vpack.c.b16 %v370, %v368
      %v381 = vpack.c.b16 %v373, %v371
      %v382 = vpack.c.b16 %v374, %v372
      %vm391 = vcmask 523264
      %v393 = vsel %vm391, %v347, 0
      %v396 = vsel %vm391, %v348, 0
      %v399 = vsel %vm391, %v349, 0
      %v402 = vsel %vm391, %v350, 0
      %404 = vmatpush.bf16.msra.mxu0 0
      %405 = vmatpush.bf16.msra.mxu0 0
      %406 = vmatpush.bf16.msra.mxu0 0
      %407 = vmatpush.bf16.msra.mxu0 0
      %408 = vmatpush.bf16.msra.mxu0 %v381
      %409 = vmatpush.bf16.msra.mxu0 %v379
      %410 = vmatpush.bf16.msra.mxu0 %v377
      %411 = vmatpush.bf16.msra.mxu0 %v375
      %412 = vmatmul.bf16.gmra.mxu0 %v393
      %v413 = vpop.f32.mrf.mxu0
      %v414 = vadd.f32 %v327, %v413
      %v415 = vpop.f32.mrf.mxu0
      %v416 = vadd.f32 %v327, %v415
      %417 = vmatmul.bf16.gmra.mxu0 %v396
      %v418 = vpop.f32.mrf.mxu0
      %v419 = vadd.f32 %v327, %v418
      %v420 = vpop.f32.mrf.mxu0
      %v421 = vadd.f32 %v327, %v420
      %422 = vmatmul.bf16.gmra.mxu0 %v399
      %v423 = vpop.f32.mrf.mxu0
      %v424 = vadd.f32 %v327, %v423
      %v425 = vpop.f32.mrf.mxu0
      %v426 = vadd.f32 %v327, %v425
      %427 = vmatmul.bf16.gmra.mxu0 %v402
      %v428 = vpop.f32.mrf.mxu0
      %v429 = vadd.f32 %v327, %v428
      %v430 = vpop.f32.mrf.mxu0
      %v431 = vadd.f32 %v327, %v430
      %432 = vdwg.mxu0
      %433 = vmatpush.bf16.msra.mxu0 0
      %434 = vmatpush.bf16.msra.mxu0 0
      %435 = vmatpush.bf16.msra.mxu0 0
      %436 = vmatpush.bf16.msra.mxu0 0
      %437 = vmatpush.bf16.msra.mxu0 %v382
      %438 = vmatpush.bf16.msra.mxu0 %v380
      %439 = vmatpush.bf16.msra.mxu0 %v378
      %440 = vmatpush.bf16.msra.mxu0 %v376
      %441 = vmatmul.bf16.gmra.mxu0 %v393
      %v442 = vpop.f32.mrf.mxu0
      %v443 = vadd.f32 %v328, %v442
      %v444 = vpop.f32.mrf.mxu0
      %v445 = vadd.f32 %v328, %v444
      %446 = vmatmul.bf16.gmra.mxu0 %v396
      %v447 = vpop.f32.mrf.mxu0
      %v448 = vadd.f32 %v328, %v447
      %v449 = vpop.f32.mrf.mxu0
      %v450 = vadd.f32 %v328, %v449
      %451 = vmatmul.bf16.gmra.mxu0 %v399
      %v452 = vpop.f32.mrf.mxu0
      %v453 = vadd.f32 %v328, %v452
      %v454 = vpop.f32.mrf.mxu0
      %v455 = vadd.f32 %v328, %v454
      %456 = vmatmul.bf16.gmra.mxu0 %v402
      %v457 = vpop.f32.mrf.mxu0
      %v458 = vadd.f32 %v328, %v457
      %v459 = vpop.f32.mrf.mxu0
      %v460 = vadd.f32 %v328, %v459
      %461 = vdwg.mxu0
      %v462 = vmax.f32 %v414, 0.0
      %v463 = vmax.f32 %v443, 0.0
      %v464 = vmax.f32 %v416, 0.0
      %v465 = vmax.f32 %v445, 0.0
      %v466 = vmax.f32 %v419, 0.0
      %v467 = vmax.f32 %v448, 0.0
      %v468 = vmax.f32 %v421, 0.0
      %v469 = vmax.f32 %v450, 0.0
      %v470 = vmax.f32 %v424, 0.0
      %v471 = vmax.f32 %v453, 0.0
      %v472 = vmax.f32 %v426, 0.0
      %v473 = vmax.f32 %v455, 0.0
      %v474 = vmax.f32 %v429, 0.0
      %v475 = vmax.f32 %v458, 0.0
      %v476 = vmax.f32 %v431, 0.0
      %v477 = vmax.f32 %v460, 0.0
      %v478 = vpack.c.bf16 %v464, %v462
      %v479 = vpack.c.bf16 %v465, %v463
      %v480 = vpack.c.bf16 %v468, %v466
      %v481 = vpack.c.bf16 %v469, %v467
      %v482 = vpack.c.bf16 %v472, %v470
      %v483 = vpack.c.bf16 %v473, %v471
      %v484 = vpack.c.bf16 %v476, %v474
      %v485 = vpack.c.bf16 %v477, %v475
      %v486 = vld [vmem:[%s3] sm:$0xf]
      %v487 = vld [vmem:[%s3 + $0x4] sm:$0xf]
      %v488 = vld [vmem:[%s3 + $0x8] sm:$0xf]
      %v489 = vld [vmem:[%s3 + $0xc] sm:$0xf]
      %v490 = vld [vmem:[%s3 + $0x10] sm:$0xf]
      %v491 = vld [vmem:[%s3 + $0x14] sm:$0xf]
      %v492 = vld [vmem:[%s3 + $0x18] sm:$0xf]
      %v493 = vld [vmem:[%s3 + $0x1c] sm:$0xf]
      %v494 = vld [vmem:[%s3 + $0x20] sm:$0xf]
      %v495 = vld [vmem:[%s3 + $0x24] sm:$0xf]
      %v496 = vld [vmem:[%s3 + $0x28] sm:$0xf]
      %v497 = vld [vmem:[%s3 + $0x2c] sm:$0xf]
      %v498 = vld [vmem:[%s3 + $0x30] sm:$0xf]
      %v499 = vld [vmem:[%s3 + $0x34] sm:$0xf]
      %v500 = vld [vmem:[%s3 + $0x38] sm:$0xf]
      %v501 = vld [vmem:[%s3 + $0x3c] sm:$0xf]
      %v502 = vld [vmem:[%s3 + $0x40] sm:$0xf]
      %v503 = vld [vmem:[%s3 + $0x44] sm:$0xf]
      %v504 = vld [vmem:[%s3 + $0x48] sm:$0xf]
      %v505 = vld [vmem:[%s3 + $0x4c] sm:$0xf]
      %v506 = vld [vmem:[%s3 + $0x50] sm:$0xf]
      %v507 = vld [vmem:[%s3 + $0x54] sm:$0xf]
      %v508 = vld [vmem:[%s3 + $0x58] sm:$0xf]
      %v509 = vld [vmem:[%s3 + $0x5c] sm:$0xf]
      %v510 = vld [vmem:[%s4] sm:$0x1]
      %v512 = vperm.slane %v510, 0
      %v538 = vunpack.c.l.b16 %v486
      %v539 = vunpack.c.l.b16 %v487
      %v540 = vunpack.c.l.b16 %v488
      %v541 = vunpack.c.l.b16 %v489
      %v542 = vunpack.c.l.b16 %v490
      %v543 = vunpack.c.l.b16 %v491
      %v544 = vunpack.c.l.b16 %v492
      %v545 = vunpack.c.l.b16 %v493
      %v546 = vunpack.c.l.b16 %v494
      %v547 = vunpack.c.l.b16 %v495
      %v548 = vunpack.c.l.b16 %v496
      %v549 = vunpack.c.l.b16 %v497
      %v550 = vunpack.c.l.b16 %v498
      %v551 = vunpack.c.l.b16 %v499
      %v552 = vunpack.c.l.b16 %v500
      %v553 = vunpack.c.l.b16 %v501
      %v554 = vunpack.c.l.b16 %v502
      %v555 = vunpack.c.l.b16 %v503
      %v556 = vunpack.c.l.b16 %v504
      %v557 = vunpack.c.l.b16 %v505
      %v558 = vunpack.c.l.b16 %v506
      %v559 = vunpack.c.l.b16 %v507
      %v560 = vunpack.c.l.b16 %v508
      %v561 = vunpack.c.l.b16 %v509
      %v562 = vpack.c.b16 %v539, %v538
      %v563 = vpack.c.b16 %v541, %v540
      %v564 = vpack.c.b16 %v543, %v542
      %v565 = vpack.c.b16 %v545, %v544
      %v566 = vpack.c.b16 %v547, %v546
      %v567 = vpack.c.b16 %v549, %v548
      %v568 = vpack.c.b16 %v551, %v550
      %v569 = vpack.c.b16 %v553, %v552
      %v570 = vpack.c.b16 %v555, %v554
      %v571 = vpack.c.b16 %v557, %v556
      %v572 = vpack.c.b16 %v559, %v558
      %v573 = vpack.c.b16 %v561, %v560
      %v587 = vsel %vm391, %v479, 0
      %v590 = vsel %vm391, %v481, 0
      %v593 = vsel %vm391, %v483, 0
      %v596 = vsel %vm391, %v485, 0
      %598 = vmatpush.bf16.msra.mxu0 %v569
      %599 = vmatpush.bf16.msra.mxu0 %v568
      %600 = vmatpush.bf16.msra.mxu0 %v567
      %601 = vmatpush.bf16.msra.mxu0 %v566
      %602 = vmatpush.bf16.msra.mxu0 %v565
      %603 = vmatpush.bf16.msra.mxu0 %v564
      %604 = vmatpush.bf16.msra.mxu0 %v563
      %605 = vmatpush.bf16.msra.mxu0 %v562
      %606 = vmatmul.bf16.gmra.mxu0 %v478
      %v607 = vpop.f32.mrf.mxu0
      %v608 = vadd.f32 %v512, %v607
      %v609 = vpop.f32.mrf.mxu0
      %v610 = vadd.f32 %v512, %v609
      %611 = vmatmul.bf16.gmra.mxu0 %v480
      %v612 = vpop.f32.mrf.mxu0
      %v613 = vadd.f32 %v512, %v612
      %v614 = vpop.f32.mrf.mxu0
      %v615 = vadd.f32 %v512, %v614
      %616 = vmatmul.bf16.gmra.mxu0 %v482
      %v617 = vpop.f32.mrf.mxu0
      %v618 = vadd.f32 %v512, %v617
      %v619 = vpop.f32.mrf.mxu0
      %v620 = vadd.f32 %v512, %v619
      %621 = vmatmul.bf16.gmra.mxu0 %v484
      %v622 = vpop.f32.mrf.mxu0
      %v623 = vadd.f32 %v512, %v622
      %v624 = vpop.f32.mrf.mxu0
      %v625 = vadd.f32 %v512, %v624
      %626 = vdwg.mxu0
      %627 = vmatpush.bf16.msra.mxu0 0
      %628 = vmatpush.bf16.msra.mxu0 0
      %629 = vmatpush.bf16.msra.mxu0 0
      %630 = vmatpush.bf16.msra.mxu0 0
      %631 = vmatpush.bf16.msra.mxu0 %v573
      %632 = vmatpush.bf16.msra.mxu0 %v572
      %633 = vmatpush.bf16.msra.mxu0 %v571
      %634 = vmatpush.bf16.msra.mxu0 %v570
      %635 = vmatmul.bf16.gmra.mxu0 %v587
      %v636 = vpop.f32.mrf.mxu0
      %v637 = vadd.f32 %v608, %v636
      %v638 = vpop.f32.mrf.mxu0
      %v639 = vadd.f32 %v610, %v638
      %640 = vmatmul.bf16.gmra.mxu0 %v590
      %v641 = vpop.f32.mrf.mxu0
      %v642 = vadd.f32 %v613, %v641
      %v643 = vpop.f32.mrf.mxu0
      %v644 = vadd.f32 %v615, %v643
      %645 = vmatmul.bf16.gmra.mxu0 %v593
      %v646 = vpop.f32.mrf.mxu0
      %v647 = vadd.f32 %v618, %v646
      %v648 = vpop.f32.mrf.mxu0
      %v649 = vadd.f32 %v620, %v648
      %650 = vmatmul.bf16.gmra.mxu0 %v596
      %v651 = vpop.f32.mrf.mxu0
      %v652 = vadd.f32 %v623, %v651
      %v653 = vpop.f32.mrf.mxu0
      %v654 = vadd.f32 %v625, %v653
      %655 = vdwg.mxu0
      %v656 = vmax.f32 %v637, 0.0
      %v657 = vmax.f32 %v639, 0.0
      %v658 = vmax.f32 %v642, 0.0
      %v659 = vmax.f32 %v644, 0.0
      %v660 = vmax.f32 %v647, 0.0
      %v661 = vmax.f32 %v649, 0.0
      %v662 = vmax.f32 %v652, 0.0
      %v663 = vmax.f32 %v654, 0.0
      %v664 = vpack.c.bf16 %v657, %v656
      %v665 = vpack.c.bf16 %v659, %v658
      %v666 = vpack.c.bf16 %v661, %v660
      %v667 = vpack.c.bf16 %v663, %v662
      %v668 = vld [vmem:[%s5] sm:$0xf]
      %v669 = vld [vmem:[%s5 + $0x4] sm:$0xf]
      %v670 = vld [vmem:[%s5 + $0x8] sm:$0xf]
      %v671 = vld [vmem:[%s5 + $0xc] sm:$0xf]
      %v672 = vld [vmem:[%s5 + $0x10] sm:$0xf]
      %v673 = vld [vmem:[%s5 + $0x14] sm:$0xf]
      %v674 = vld [vmem:[%s5 + $0x18] sm:$0xf]
      %v675 = vld [vmem:[%s5 + $0x1c] sm:$0xf]
      %v676 = vld [vmem:[%s5 + $0x20] sm:$0xf]
      %v677 = vld [vmem:[%s5 + $0x24] sm:$0xf]
      %v678 = vld [vmem:[%s5 + $0x28] sm:$0xf]
      %v679 = vld [vmem:[%s5 + $0x2c] sm:$0xf]
      %v680 = vld [vmem:[%s5 + $0x30] sm:$0xf]
      %v681 = vld [vmem:[%s5 + $0x34] sm:$0xf]
      %v682 = vld [vmem:[%s5 + $0x38] sm:$0xf]
      %v683 = vld [vmem:[%s5 + $0x3c] sm:$0xf]
      %v700 = vunpack.c.l.b16 %v668
      %v701 = vunpack.c.l.b16 %v669
      %v702 = vunpack.c.l.b16 %v670
      %v703 = vunpack.c.l.b16 %v671
      %v704 = vunpack.c.l.b16 %v672
      %v705 = vunpack.c.l.b16 %v673
      %v706 = vunpack.c.l.b16 %v674
      %v707 = vunpack.c.l.b16 %v675
      %v708 = vunpack.c.l.b16 %v676
      %v709 = vunpack.c.l.b16 %v677
      %v710 = vunpack.c.l.b16 %v678
      %v711 = vunpack.c.l.b16 %v679
      %v712 = vunpack.c.l.b16 %v680
      %v713 = vunpack.c.l.b16 %v681
      %v714 = vunpack.c.l.b16 %v682
      %v715 = vunpack.c.l.b16 %v683
      %v716 = vpack.c.b16 %v701, %v700
      %v717 = vpack.c.b16 %v703, %v702
      %v718 = vpack.c.b16 %v705, %v704
      %v719 = vpack.c.b16 %v707, %v706
      %v720 = vpack.c.b16 %v709, %v708
      %v721 = vpack.c.b16 %v711, %v710
      %v722 = vpack.c.b16 %v713, %v712
      %v723 = vpack.c.b16 %v715, %v714
      %732 = vmatpush.bf16.msra.mxu0 %v723
      %733 = vmatpush.bf16.msra.mxu0 %v722
      %734 = vmatpush.bf16.msra.mxu0 %v721
      %735 = vmatpush.bf16.msra.mxu0 %v720
      %736 = vmatpush.bf16.msra.mxu0 %v719
      %737 = vmatpush.bf16.msra.mxu0 %v718
      %738 = vmatpush.bf16.msra.mxu0 %v717
      %739 = vmatpush.bf16.msra.mxu0 %v716
      %740 = vmatmul.bf16.gmra.mxu0 %v664
      %v741 = vpop.f32.mrf.mxu0
      %v742 = vadd.f32 0.0, %v741
      %v743 = vpop.f32.mrf.mxu0
      %v744 = vadd.f32 0.0, %v743
      %745 = vmatmul.bf16.gmra.mxu0 %v665
      %v746 = vpop.f32.mrf.mxu0
      %v747 = vadd.f32 0.0, %v746
      %v748 = vpop.f32.mrf.mxu0
      %v749 = vadd.f32 0.0, %v748
      %750 = vmatmul.bf16.gmra.mxu0 %v666
      %v751 = vpop.f32.mrf.mxu0
      %v752 = vadd.f32 0.0, %v751
      %v753 = vpop.f32.mrf.mxu0
      %v754 = vadd.f32 0.0, %v753
      %755 = vmatmul.bf16.gmra.mxu0 %v667
      %v756 = vpop.f32.mrf.mxu0
      %v757 = vadd.f32 0.0, %v756
      %v758 = vpop.f32.mrf.mxu0
      %v759 = vadd.f32 0.0, %v758
      %760 = vdwg.mxu0
      %v761 = vlaneseq
      %v762 = vand.u32 %v761, 127
      %vm763 = vcmp.lt.s32.totalorder %v762, 64
      %v764 = vmul.f32 %v742, %v742
      %v765 = vmul.f32 %v744, %v744
      %v766 = vmul.f32 %v747, %v747
      %v767 = vmul.f32 %v749, %v749
      %v768 = vmul.f32 %v752, %v752
      %v769 = vmul.f32 %v754, %v754
      %v770 = vmul.f32 %v757, %v757
      %v771 = vmul.f32 %v759, %v759
      %v772 = vsel %vm763, %v764, 0.0
      %v773 = vsel %vm763, %v765, 0.0
      %v774 = vsel %vm763, %v766, 0.0
      %v775 = vsel %vm763, %v767, 0.0
      %v776 = vsel %vm763, %v768, 0.0
      %v777 = vsel %vm763, %v769, 0.0
      %v778 = vsel %vm763, %v770, 0.0
      %v779 = vsel %vm763, %v771, 0.0
      %780 = vadd.xlane.f32.xlu0 %v772
      %v781 = vpop.xlane.xlu0 %780
      %782 = vadd.xlane.f32.xlu0 %v773
      %v783 = vpop.xlane.xlu0 %782
      %784 = vadd.xlane.f32.xlu0 %v774
      %v785 = vpop.xlane.xlu0 %784
      %786 = vadd.xlane.f32.xlu0 %v775
      %v787 = vpop.xlane.xlu0 %786
      %788 = vadd.xlane.f32.xlu0 %v776
      %v789 = vpop.xlane.xlu0 %788
      %790 = vadd.xlane.f32.xlu0 %v777
      %v791 = vpop.xlane.xlu0 %790
      %792 = vadd.xlane.f32.xlu0 %v778
      %v793 = vpop.xlane.xlu0 %792
      %794 = vadd.xlane.f32.xlu0 %v779
      %v795 = vpop.xlane.xlu0 %794
      %v796 = vmax.f32 %v781, 1e-24
      %v797 = vmax.f32 %v783, 1e-24
      %v798 = vmax.f32 %v785, 1e-24
      %v799 = vmax.f32 %v787, 1e-24
      %v800 = vmax.f32 %v789, 1e-24
      %v801 = vmax.f32 %v791, 1e-24
      %v802 = vmax.f32 %v793, 1e-24
      %v803 = vmax.f32 %v795, 1e-24
      %v804 = vrsqrt.pop %v796
      %v805 = vmul.f32 %v804, %v796
      %v806 = vmul.f32 %v805, %v804
      %v807 = vmul.f32 0.5, %v806
      %v808 = vsub.f32 1.5, %v807
      %v809 = vmul.f32 %v804, %v808
      %vm810 = vweird.f32 %v796
      %vm811 = vweird.f32 %v804
      %vm812 = vmor %vm810, %vm811
      %v813 = vsel %vm812, %v804, %v809
      %v814 = vrsqrt.pop %v797
      %v815 = vmul.f32 %v814, %v797
      %v816 = vmul.f32 %v815, %v814
      %v817 = vmul.f32 0.5, %v816
      %v818 = vsub.f32 1.5, %v817
      %v819 = vmul.f32 %v814, %v818
      %vm820 = vweird.f32 %v797
      %vm821 = vweird.f32 %v814
      %vm822 = vmor %vm820, %vm821
      %v823 = vsel %vm822, %v814, %v819
      %v824 = vrsqrt.pop %v798
      %v825 = vmul.f32 %v824, %v798
      %v826 = vmul.f32 %v825, %v824
      %v827 = vmul.f32 0.5, %v826
      %v828 = vsub.f32 1.5, %v827
      %v829 = vmul.f32 %v824, %v828
      %vm830 = vweird.f32 %v798
      %vm831 = vweird.f32 %v824
      %vm832 = vmor %vm830, %vm831
      %v833 = vsel %vm832, %v824, %v829
      %v834 = vrsqrt.pop %v799
      %v835 = vmul.f32 %v834, %v799
      %v836 = vmul.f32 %v835, %v834
      %v837 = vmul.f32 0.5, %v836
      %v838 = vsub.f32 1.5, %v837
      %v839 = vmul.f32 %v834, %v838
      %vm840 = vweird.f32 %v799
      %vm841 = vweird.f32 %v834
      %vm842 = vmor %vm840, %vm841
      %v843 = vsel %vm842, %v834, %v839
      %v844 = vrsqrt.pop %v800
      %v845 = vmul.f32 %v844, %v800
      %v846 = vmul.f32 %v845, %v844
      %v847 = vmul.f32 0.5, %v846
      %v848 = vsub.f32 1.5, %v847
      %v849 = vmul.f32 %v844, %v848
      %vm850 = vweird.f32 %v800
      %vm851 = vweird.f32 %v844
      %vm852 = vmor %vm850, %vm851
      %v853 = vsel %vm852, %v844, %v849
      %v854 = vrsqrt.pop %v801
      %v855 = vmul.f32 %v854, %v801
      %v856 = vmul.f32 %v855, %v854
      %v857 = vmul.f32 0.5, %v856
      %v858 = vsub.f32 1.5, %v857
      %v859 = vmul.f32 %v854, %v858
      %vm860 = vweird.f32 %v801
      %vm861 = vweird.f32 %v854
      %vm862 = vmor %vm860, %vm861
      %v863 = vsel %vm862, %v854, %v859
      %v864 = vrsqrt.pop %v802
      %v865 = vmul.f32 %v864, %v802
      %v866 = vmul.f32 %v865, %v864
      %v867 = vmul.f32 0.5, %v866
      %v868 = vsub.f32 1.5, %v867
      %v869 = vmul.f32 %v864, %v868
      %vm870 = vweird.f32 %v802
      %vm871 = vweird.f32 %v864
      %vm872 = vmor %vm870, %vm871
      %v873 = vsel %vm872, %v864, %v869
      %v874 = vrsqrt.pop %v803
      %v875 = vmul.f32 %v874, %v803
      %v876 = vmul.f32 %v875, %v874
      %v877 = vmul.f32 0.5, %v876
      %v878 = vsub.f32 1.5, %v877
      %v879 = vmul.f32 %v874, %v878
      %vm880 = vweird.f32 %v803
      %vm881 = vweird.f32 %v874
      %vm882 = vmor %vm880, %vm881
      %v883 = vsel %vm882, %v874, %v879
      %v884 = vmul.f32 %v742, %v813
      %v885 = vmul.f32 %v744, %v823
      %v886 = vmul.f32 %v747, %v833
      %v887 = vmul.f32 %v749, %v843
      %v888 = vmul.f32 %v752, %v853
      %v889 = vmul.f32 %v754, %v863
      %v890 = vmul.f32 %v757, %v873
      %v891 = vmul.f32 %v759, %v883
      %v892 = vxor.u32 %v742, 2147483648
      %v893 = vxor.u32 %v744, 2147483648
      %v894 = vxor.u32 %v747, 2147483648
      %v895 = vxor.u32 %v749, 2147483648
      %v896 = vxor.u32 %v752, 2147483648
      %v897 = vxor.u32 %v754, 2147483648
      %v898 = vxor.u32 %v757, 2147483648
      %v899 = vxor.u32 %v759, 2147483648
      %v900 = vmul.f32 %v892, 1.442695
      %v901 = vpow.pop %v900
      %v902 = vmul.f32 %v893, 1.442695
      %v903 = vpow.pop %v902
      %v904 = vmul.f32 %v894, 1.442695
      %v905 = vpow.pop %v904
      %v906 = vmul.f32 %v895, 1.442695
      %v907 = vpow.pop %v906
      %v908 = vmul.f32 %v896, 1.442695
      %v909 = vpow.pop %v908
      %v910 = vmul.f32 %v897, 1.442695
      %v911 = vpow.pop %v910
      %v912 = vmul.f32 %v898, 1.442695
      %v913 = vpow.pop %v912
      %v914 = vmul.f32 %v899, 1.442695
      %v915 = vpow.pop %v914
      %v916 = vadd.f32 %v901, 1.0
      %v917 = vadd.f32 %v903, 1.0
      %v918 = vadd.f32 %v905, 1.0
      %v919 = vadd.f32 %v907, 1.0
      %v920 = vadd.f32 %v909, 1.0
      %v921 = vadd.f32 %v911, 1.0
      %v922 = vadd.f32 %v913, 1.0
      %v923 = vadd.f32 %v915, 1.0
      %v924 = vrcp.pop %v916
      %v925 = vmul.f32 %v916, %v924
      %v926 = vsub.f32 1.0, %v925
      %v927 = vmul.f32 %v924, %v926
      %v928 = vadd.f32 %v924, %v927
      %vm929 = vweird.f32 %v916
      %vm930 = vweird.f32 %v924
      %vm931 = vmor %vm929, %vm930
      %v932 = vsel %vm931, %v924, %v928
      %v933 = vand.u32 2147483647, %v916
      %vm934 = vcmp.eq.f32.partialorder %v933, 8.507059e+37
      %v935 = vand.u32 %v916, 2147483648
      %v936 = vor.u32 1.1754944e-38, %v935
      %v937 = vsel %vm934, %v936, %v932
      %v938 = vmul.f32 1.0, %v937
      %v939 = vrcp.pop %v917
      %v940 = vmul.f32 %v917, %v939
      %v941 = vsub.f32 1.0, %v940
      %v942 = vmul.f32 %v939, %v941
      %v943 = vadd.f32 %v939, %v942
      %vm944 = vweird.f32 %v917
      %vm945 = vweird.f32 %v939
      %vm946 = vmor %vm944, %vm945
      %v947 = vsel %vm946, %v939, %v943
      %v948 = vand.u32 2147483647, %v917
      %vm949 = vcmp.eq.f32.partialorder %v948, 8.507059e+37
      %v950 = vand.u32 %v917, 2147483648
      %v951 = vor.u32 1.1754944e-38, %v950
      %v952 = vsel %vm949, %v951, %v947
      %v953 = vmul.f32 1.0, %v952
      %v954 = vrcp.pop %v918
      %v955 = vmul.f32 %v918, %v954
      %v956 = vsub.f32 1.0, %v955
      %v957 = vmul.f32 %v954, %v956
      %v958 = vadd.f32 %v954, %v957
      %vm959 = vweird.f32 %v918
      %vm960 = vweird.f32 %v954
      %vm961 = vmor %vm959, %vm960
      %v962 = vsel %vm961, %v954, %v958
      %v963 = vand.u32 2147483647, %v918
      %vm964 = vcmp.eq.f32.partialorder %v963, 8.507059e+37
      %v965 = vand.u32 %v918, 2147483648
      %v966 = vor.u32 1.1754944e-38, %v965
      %v967 = vsel %vm964, %v966, %v962
      %v968 = vmul.f32 1.0, %v967
      %v969 = vrcp.pop %v919
      %v970 = vmul.f32 %v919, %v969
      %v971 = vsub.f32 1.0, %v970
      %v972 = vmul.f32 %v969, %v971
      %v973 = vadd.f32 %v969, %v972
      %vm974 = vweird.f32 %v919
      %vm975 = vweird.f32 %v969
      %vm976 = vmor %vm974, %vm975
      %v977 = vsel %vm976, %v969, %v973
      %v978 = vand.u32 2147483647, %v919
      %vm979 = vcmp.eq.f32.partialorder %v978, 8.507059e+37
      %v980 = vand.u32 %v919, 2147483648
      %v981 = vor.u32 1.1754944e-38, %v980
      %v982 = vsel %vm979, %v981, %v977
      %v983 = vmul.f32 1.0, %v982
      %v984 = vrcp.pop %v920
      %v985 = vmul.f32 %v920, %v984
      %v986 = vsub.f32 1.0, %v985
      %v987 = vmul.f32 %v984, %v986
      %v988 = vadd.f32 %v984, %v987
      %vm989 = vweird.f32 %v920
      %vm990 = vweird.f32 %v984
      %vm991 = vmor %vm989, %vm990
      %v992 = vsel %vm991, %v984, %v988
      %v993 = vand.u32 2147483647, %v920
      %vm994 = vcmp.eq.f32.partialorder %v993, 8.507059e+37
      %v995 = vand.u32 %v920, 2147483648
      %v996 = vor.u32 1.1754944e-38, %v995
      %v997 = vsel %vm994, %v996, %v992
      %v998 = vmul.f32 1.0, %v997
      %v999 = vrcp.pop %v921
      %v1000 = vmul.f32 %v921, %v999
      %v1001 = vsub.f32 1.0, %v1000
      %v1002 = vmul.f32 %v999, %v1001
      %v1003 = vadd.f32 %v999, %v1002
      %vm1004 = vweird.f32 %v921
      %vm1005 = vweird.f32 %v999
      %vm1006 = vmor %vm1004, %vm1005
      %v1007 = vsel %vm1006, %v999, %v1003
      %v1008 = vand.u32 2147483647, %v921
      %vm1009 = vcmp.eq.f32.partialorder %v1008, 8.507059e+37
      %v1010 = vand.u32 %v921, 2147483648
      %v1011 = vor.u32 1.1754944e-38, %v1010
      %v1012 = vsel %vm1009, %v1011, %v1007
      %v1013 = vmul.f32 1.0, %v1012
      %v1014 = vrcp.pop %v922
      %v1015 = vmul.f32 %v922, %v1014
      %v1016 = vsub.f32 1.0, %v1015
      %v1017 = vmul.f32 %v1014, %v1016
      %v1018 = vadd.f32 %v1014, %v1017
      %vm1019 = vweird.f32 %v922
      %vm1020 = vweird.f32 %v1014
      %vm1021 = vmor %vm1019, %vm1020
      %v1022 = vsel %vm1021, %v1014, %v1018
      %v1023 = vand.u32 2147483647, %v922
      %vm1024 = vcmp.eq.f32.partialorder %v1023, 8.507059e+37
      %v1025 = vand.u32 %v922, 2147483648
      %v1026 = vor.u32 1.1754944e-38, %v1025
      %v1027 = vsel %vm1024, %v1026, %v1022
      %v1028 = vmul.f32 1.0, %v1027
      %v1029 = vrcp.pop %v923
      %v1030 = vmul.f32 %v923, %v1029
      %v1031 = vsub.f32 1.0, %v1030
      %v1032 = vmul.f32 %v1029, %v1031
      %v1033 = vadd.f32 %v1029, %v1032
      %vm1034 = vweird.f32 %v923
      %vm1035 = vweird.f32 %v1029
      %vm1036 = vmor %vm1034, %vm1035
      %v1037 = vsel %vm1036, %v1029, %v1033
      %v1038 = vand.u32 2147483647, %v923
      %vm1039 = vcmp.eq.f32.partialorder %v1038, 8.507059e+37
      %v1040 = vand.u32 %v923, 2147483648
      %v1041 = vor.u32 1.1754944e-38, %v1040
      %v1042 = vsel %vm1039, %v1041, %v1037
      %v1043 = vmul.f32 1.0, %v1042
      %v1044 = vsel %vm763, %v884, %v938
      %v1045 = vsel %vm763, %v885, %v953
      %v1046 = vsel %vm763, %v886, %v968
      %v1047 = vsel %vm763, %v887, %v983
      %v1048 = vsel %vm763, %v888, %v998
      %v1049 = vsel %vm763, %v889, %v1013
      %v1050 = vsel %vm763, %v890, %v1028
      %v1051 = vsel %vm763, %v891, %v1043
      %v1052 = vpack.c.bf16 %v1044, %v1044
      %v1053 = vpack.c.bf16 %v1045, %v1045
      %v1054 = vpack.c.bf16 %v1046, %v1046
      %v1055 = vpack.c.bf16 %v1047, %v1047
      %v1056 = vpack.c.bf16 %v1048, %v1048
      %v1057 = vpack.c.bf16 %v1049, %v1049
      %v1058 = vpack.c.bf16 %v1050, %v1050
      %v1059 = vpack.c.bf16 %v1051, %v1051
      %1060 = vst [vmem:[%s306] sm:$0xf] %v1052
      %1061 = vst [vmem:[%s306 + $0x4] sm:$0xf] %v1053
      %1062 = vst [vmem:[%s306 + $0x8] sm:$0xf] %v1054
      %1063 = vst [vmem:[%s306 + $0xc] sm:$0xf] %v1055
      %1064 = vst [vmem:[%s306 + $0x10] sm:$0xf] %v1056
      %1065 = vst [vmem:[%s306 + $0x14] sm:$0xf] %v1057
      %1066 = vst [vmem:[%s306 + $0x18] sm:$0xf] %v1058
      %1067 = vst [vmem:[%s306 + $0x1c] sm:$0xf] %v1059
      %s1068 = smul.u32 8, %s22
      %p1069 = scmp.lt.s32.totalorder %s21, 1
      %s1070 = scalar_select %p1069, %s21, 1
      %p1071 = scmp.lt.s32.totalorder %s1068, 7
      %s1072 = scalar_select %p1071, %s1068, 7
      %s1073 = smul.addr %s1070, 8
      %s1074 = sadd.s32 %s1072, %s1073
      %s1075 = smul.addr %s1074, 4
      %s1076 = scalar_lea.vmem %s6, %s1075
      // Predicated region
      $region45: #{vp2p_forward.2} parent=43 // pred_check
        %p1077 = pneg %p187
      $region46: #{vp2p_forward.2} parent=43 // pred_check_branch
        %1079 = sbr.rel (%p1077) target = $region48
      $region47: #{vp2p_forward.2} parent=43 // pred_region
        %s1080 = smul.u32 8, %s22
      $region48: #{vp2p_forward.2} parent=43 // pred_fallthru
        _
    $region44: #{vp2p_forward.2} parent=5 // pred_fallthru
      _
    %p1081 = scmp.le.s32.totalorder 2, %s12
    // Predicated region
    $region49: #{vp2p_forward.2} parent=5 // pred_check
      %p1082 = pneg %p1081
    $region50: #{vp2p_forward.2} parent=5 // pred_check_branch
      %1084 = sbr.rel (%p1082) target = $region52
    $region51: #{vp2p_forward.2} parent=5 // pred_region
      %s1085 = ssub.s32 %s12, 2
      // Predicated region
      $region53: #{vp2p_forward.2} parent=51 // pred_check
        %p1086 = pneg %p193
      $region54: #{vp2p_forward.2} parent=51 // pred_check_branch
        %1088 = sbr.rel (%p1086) target = $region56
      $region55: #{vp2p_forward.2} parent=51 // pred_region
        %s1089 = smul.u32 8, %s24
        %p1090 = scmp.lt.s32.totalorder %s23, 1
        %s1091 = scalar_select %p1090, %s23, 1
        %p1092 = scmp.lt.s32.totalorder %s1089, 7
        %s1093 = scalar_select %p1092, %s1089, 7
        %s1094 = smul.addr %s1091, 8
        %s1095 = sadd.s32 %s1093, %s1094
        %s1096 = smul.addr %s1095, 4
        %s1097 = scalar_lea.vmem %s6, %s1096
      $region56: #{vp2p_forward.2} parent=51 // pred_fallthru
        _
    $region52: #{vp2p_forward.2} parent=5 // pred_fallthru
      _
  $region6: #{vp2p_forward.2} parent=0 // loop_footer
    %s16 = sadd.s32 1, %s12
  $region7: #{vp2p_forward.2} parent=0 // loop_footer_branch
    %11 = sbr.rel target = $region3
  $region8: #{vp2p_forward.2} parent=0 // loop_exit
    _

// kernel: vp2p_forward.3
$region0: #{vp2p_forward.3}
  #allocation0 [shape = 'u32[]', space=smem, size = 0x4, offset = 0x4, fixed_abs, tag = 'smem constant byte address 0x4 - core index']
  #allocation1 [shape = 'u32[72,128]{1,0:T(1,128)}', space=vmem, size = 0x9000, scoped, tag = 'internal scratch']
  %s0 = inlined_call_operand.vmem [shape: f32[2,1,256], index: 0, kind: input, shape index: {}]
  %s1 = inlined_call_operand.vmem [shape: bf16[2,128,128], index: 1, kind: input, shape index: {}]
  %s2 = inlined_call_operand.vmem [shape: bf16[128,256], index: 2, kind: input, shape index: {}]
  %s3 = inlined_call_operand.vmem [shape: bf16[256,192], index: 3, kind: input, shape index: {}]
  %s4 = inlined_call_operand.vmem [shape: f32[1,192], index: 4, kind: input, shape index: {}]
  %s5 = inlined_call_operand.vmem [shape: bf16[192,128], index: 5, kind: input, shape index: {}]
  %s6 = inlined_call_operand.vmem [shape: bf16[2,128,128], index: 6, kind: output, shape index: {}]
  %s7 = sld [smem:[#allocation0]]
  $region57: #{vp2p_forward.3} parent=0
    _
  %s9 = ssub.s32 1, %s7
  %s10 = scalar_select 0, %s9, %s7
  loop: start=0, step=1, limit=4
  $region2: #{vp2p_forward.3} parent=0 // loop_pre_header
    _
  $region3: #{vp2p_forward.3} parent=0 // loop_header
    %s12 = sphi 0, %s16
    %p13 = scmp.ge.s32.totalorder %s12, 4
    %s19 = sphi 0, %s31
    %s20 = sphi 0, %s27
    %s21 = sphi 0, %s19
    %s22 = sphi 0, %s20
    %s23 = sphi 0, %s21
    %s24 = sphi 0, %s22
    %s34 = sphi 0, %s36
    %s37 = sphi 0, %s34
    %s38 = sphi 0, %s37
    %s54 = sphi 0, %s38
    %s62 = sphi 0, %s64
    %s65 = sphi 0, %s62
    %s66 = sphi 0, %s65
    %s82 = sphi 0, %s66
    %s86 = sphi 0, %s86
    %s88 = sphi 0, %s86
    %s89 = sphi 0, %s88
    %s103 = sphi 0, %s89
    %s107 = sphi 0, %s107
    %s109 = sphi 0, %s107
    %s110 = sphi 0, %s109
    %s124 = sphi 0, %s110
    %s128 = sphi 0, %s128
    %s130 = sphi 0, %s128
    %s131 = sphi 0, %s130
    %s145 = sphi 0, %s131
    %s149 = sphi 0, %s149
    %s151 = sphi 0, %s149
    %s152 = sphi 0, %s151
    %s166 = sphi 0, %s152
    %s174 = sphi 0, %s176
    %s177 = sphi 0, %s174
    %s178 = sphi 0, %s177
    %s194 = sphi 0, %s178
  $region4: #{vp2p_forward.3} parent=0 // loop_header_branch
    %15 = sbr.rel (%p13) target = $region8
  $region5: #{vp2p_forward.3} parent=0 // loop_body
    %s17 = ssub.s32 %s12, 1
    %s18 = ssub.s32 %s12, 2
    %s25 = sadd.s32 1, %s20
    %p26 = scmp.ge.s32.totalorder %s25, 1
    %s27 = scalar_select %p26, 0, %s25
    %s28 = sadd.s32 1, %s19
    %s29 = scalar_select %p26, %s28, %s19
    %p30 = scmp.ge.s32.totalorder %s29, 2
    %s31 = scalar_select %p30, 0, %s29
    %s32 = ssub.s32 %s19, %s31
    %p33 = scmp.eq.s32.totalorder %s32, 0
    %s35 = sadd.s32 %s34, 1
    %s36 = scalar_select %p33, %s34, %s35
    %p39 = pneg %p33
    %p40 = scmp.eq.s32.totalorder %s12, 1
    %p41 = por %p39, %p40
    %p42 = scmp.ne.s32.totalorder %s34, %s37
    %p43 = scmp.eq.s32.totalorder %s12, 0
    %p44 = por %p42, %p43
    %p45 = scmp.ne.s32.totalorder %s34, %s37
    %p46 = scmp.eq.s32.totalorder %s17, 1
    %p47 = por %p45, %p46
    %p48 = scmp.ne.s32.totalorder %s37, %s38
    %p49 = scmp.eq.s32.totalorder %s17, 0
    %p50 = por %p48, %p49
    %p51 = scmp.ne.s32.totalorder %s37, %s38
    %p52 = scmp.eq.s32.totalorder %s18, 1
    %p53 = por %p51, %p52
    %p55 = scmp.ne.s32.totalorder %s38, %s54
    %p56 = scmp.eq.s32.totalorder %s18, 0
    %p57 = por %p55, %p56
    %s58 = ssub.s32 %s19, %s31
    %s59 = ssub.s32 %s20, %s27
    %s60 = sor.u32 %s58, %s59
    %p61 = scmp.eq.s32.totalorder %s60, 0
    %s63 = sadd.s32 %s62, 1
    %s64 = scalar_select %p61, %s62, %s63
    %p67 = pneg %p61
    %p68 = scmp.eq.s32.totalorder %s12, 1
    %p69 = por %p67, %p68
    %p70 = scmp.ne.s32.totalorder %s62, %s65
    %p71 = scmp.eq.s32.totalorder %s12, 0
    %p72 = por %p70, %p71
    %p73 = scmp.ne.s32.totalorder %s62, %s65
    %p74 = scmp.eq.s32.totalorder %s17, 1
    %p75 = por %p73, %p74
    %p76 = scmp.ne.s32.totalorder %s65, %s66
    %p77 = scmp.eq.s32.totalorder %s17, 0
    %p78 = por %p76, %p77
    %p79 = scmp.ne.s32.totalorder %s65, %s66
    %p80 = scmp.eq.s32.totalorder %s18, 1
    %p81 = por %p79, %p80
    %p83 = scmp.ne.s32.totalorder %s66, %s82
    %p84 = scmp.eq.s32.totalorder %s18, 0
    %p85 = por %p83, %p84
    %s87 = sadd.s32 %s86, 1
    %p90 = scmp.eq.s32.totalorder %s12, 1
    %p91 = scmp.ne.s32.totalorder %s86, %s88
    %p92 = scmp.eq.s32.totalorder %s12, 0
    %p93 = por %p91, %p92
    %p94 = scmp.ne.s32.totalorder %s86, %s88
    %p95 = scmp.eq.s32.totalorder %s17, 1
    %p96 = por %p94, %p95
    %p97 = scmp.ne.s32.totalorder %s88, %s89
    %p98 = scmp.eq.s32.totalorder %s17, 0
    %p99 = por %p97, %p98
    %p100 = scmp.ne.s32.totalorder %s88, %s89
    %p101 = scmp.eq.s32.totalorder %s18, 1
    %p102 = por %p100, %p101
    %p104 = scmp.ne.s32.totalorder %s89, %s103
    %p105 = scmp.eq.s32.totalorder %s18, 0
    %p106 = por %p104, %p105
    %s108 = sadd.s32 %s107, 1
    %p111 = scmp.eq.s32.totalorder %s12, 1
    %p112 = scmp.ne.s32.totalorder %s107, %s109
    %p113 = scmp.eq.s32.totalorder %s12, 0
    %p114 = por %p112, %p113
    %p115 = scmp.ne.s32.totalorder %s107, %s109
    %p116 = scmp.eq.s32.totalorder %s17, 1
    %p117 = por %p115, %p116
    %p118 = scmp.ne.s32.totalorder %s109, %s110
    %p119 = scmp.eq.s32.totalorder %s17, 0
    %p120 = por %p118, %p119
    %p121 = scmp.ne.s32.totalorder %s109, %s110
    %p122 = scmp.eq.s32.totalorder %s18, 1
    %p123 = por %p121, %p122
    %p125 = scmp.ne.s32.totalorder %s110, %s124
    %p126 = scmp.eq.s32.totalorder %s18, 0
    %p127 = por %p125, %p126
    %s129 = sadd.s32 %s128, 1
    %p132 = scmp.eq.s32.totalorder %s12, 1
    %p133 = scmp.ne.s32.totalorder %s128, %s130
    %p134 = scmp.eq.s32.totalorder %s12, 0
    %p135 = por %p133, %p134
    %p136 = scmp.ne.s32.totalorder %s128, %s130
    %p137 = scmp.eq.s32.totalorder %s17, 1
    %p138 = por %p136, %p137
    %p139 = scmp.ne.s32.totalorder %s130, %s131
    %p140 = scmp.eq.s32.totalorder %s17, 0
    %p141 = por %p139, %p140
    %p142 = scmp.ne.s32.totalorder %s130, %s131
    %p143 = scmp.eq.s32.totalorder %s18, 1
    %p144 = por %p142, %p143
    %p146 = scmp.ne.s32.totalorder %s131, %s145
    %p147 = scmp.eq.s32.totalorder %s18, 0
    %p148 = por %p146, %p147
    %s150 = sadd.s32 %s149, 1
    %p153 = scmp.eq.s32.totalorder %s12, 1
    %p154 = scmp.ne.s32.totalorder %s149, %s151
    %p155 = scmp.eq.s32.totalorder %s12, 0
    %p156 = por %p154, %p155
    %p157 = scmp.ne.s32.totalorder %s149, %s151
    %p158 = scmp.eq.s32.totalorder %s17, 1
    %p159 = por %p157, %p158
    %p160 = scmp.ne.s32.totalorder %s151, %s152
    %p161 = scmp.eq.s32.totalorder %s17, 0
    %p162 = por %p160, %p161
    %p163 = scmp.ne.s32.totalorder %s151, %s152
    %p164 = scmp.eq.s32.totalorder %s18, 1
    %p165 = por %p163, %p164
    %p167 = scmp.ne.s32.totalorder %s152, %s166
    %p168 = scmp.eq.s32.totalorder %s18, 0
    %p169 = por %p167, %p168
    %s170 = ssub.s32 %s19, %s31
    %s171 = ssub.s32 %s20, %s27
    %s172 = sor.u32 %s170, %s171
    %p173 = scmp.eq.s32.totalorder %s172, 0
    %s175 = sadd.s32 %s174, 1
    %s176 = scalar_select %p173, %s174, %s175
    %p179 = pneg %p173
    %p180 = scmp.eq.s32.totalorder %s12, 1
    %p181 = por %p179, %p180
    %p182 = scmp.ne.s32.totalorder %s174, %s177
    %p183 = scmp.eq.s32.totalorder %s12, 0
    %p184 = por %p182, %p183
    %p185 = scmp.ne.s32.totalorder %s174, %s177
    %p186 = scmp.eq.s32.totalorder %s17, 1
    %p187 = por %p185, %p186
    %p188 = scmp.ne.s32.totalorder %s177, %s178
    %p189 = scmp.eq.s32.totalorder %s17, 0
    %p190 = por %p188, %p189
    %p191 = scmp.ne.s32.totalorder %s177, %s178
    %p192 = scmp.eq.s32.totalorder %s18, 1
    %p193 = por %p191, %p192
    %p195 = scmp.ne.s32.totalorder %s178, %s194
    %p196 = scmp.eq.s32.totalorder %s18, 0
    %p197 = por %p195, %p196
    %p198 = scmp.le.s32.totalorder 1, %s12
    %p199 = scmp.lt.s32.totalorder %s12, 3
    %p200 = pnand %p198, %p199
    %p201 = pneg %p200
    // Predicated region
    $region9: #{vp2p_forward.3} parent=5 // pred_check
      _
    $region10: #{vp2p_forward.3} parent=5 // pred_check_branch
      %203 = sbr.rel (%p200) target = $region12
    $region11: #{vp2p_forward.3} parent=5 // pred_region
      %s204 = ssub.s32 %s12, 1
      // Predicated region
      $region13: #{vp2p_forward.3} parent=11 // pred_check
        %p205 = pneg %p99
      $region14: #{vp2p_forward.3} parent=11 // pred_check_branch
        %207 = sbr.rel (%p205) target = $region16
      $region15: #{vp2p_forward.3} parent=11 // pred_region
        _
      $region16: #{vp2p_forward.3} parent=11 // pred_fallthru
        _
      // Predicated region
      $region17: #{vp2p_forward.3} parent=11 // pred_check
        %p208 = pneg %p120
      $region18: #{vp2p_forward.3} parent=11 // pred_check_branch
        %210 = sbr.rel (%p208) target = $region20
      $region19: #{vp2p_forward.3} parent=11 // pred_region
        _
      $region20: #{vp2p_forward.3} parent=11 // pred_fallthru
        _
      // Predicated region
      $region21: #{vp2p_forward.3} parent=11 // pred_check
        %p211 = pneg %p141
      $region22: #{vp2p_forward.3} parent=11 // pred_check_branch
        %213 = sbr.rel (%p211) target = $region24
      $region23: #{vp2p_forward.3} parent=11 // pred_region
        _
      $region24: #{vp2p_forward.3} parent=11 // pred_fallthru
        _
      // Predicated region
      $region25: #{vp2p_forward.3} parent=11 // pred_check
        %p214 = pneg %p162
      $region26: #{vp2p_forward.3} parent=11 // pred_check_branch
        %216 = sbr.rel (%p214) target = $region28
      $region27: #{vp2p_forward.3} parent=11 // pred_region
        _
      $region28: #{vp2p_forward.3} parent=11 // pred_fallthru
        _
    $region12: #{vp2p_forward.3} parent=5 // pred_fallthru
      _
    %p217 = scmp.lt.s32.totalorder %s12, 2
    // Predicated region
    $region29: #{vp2p_forward.3} parent=5 // pred_check
      %p218 = pneg %p217
    $region30: #{vp2p_forward.3} parent=5 // pred_check_branch
      %220 = sbr.rel (%p218) target = $region32
    $region31: #{vp2p_forward.3} parent=5 // pred_region
      // Predicated region
      $region33: #{vp2p_forward.3} parent=31 // pred_check
        %p221 = pneg %p44
      $region34: #{vp2p_forward.3} parent=31 // pred_check_branch
        %223 = sbr.rel (%p221) target = $region36
      $region35: #{vp2p_forward.3} parent=31 // pred_region
        %p224 = scmp.lt.s32.totalorder %s19, 1
        %s225 = scalar_select %p224, %s19, 1
        %s226 = smul.addr %s225, 2
        %s227 = scalar_lea.vmem %s0, %s226
      $region36: #{vp2p_forward.3} parent=31 // pred_fallthru
        _
      // Predicated region
      $region37: #{vp2p_forward.3} parent=31 // pred_check
        %p228 = pneg %p72
      $region38: #{vp2p_forward.3} parent=31 // pred_check_branch
        %230 = sbr.rel (%p228) target = $region40
      $region39: #{vp2p_forward.3} parent=31 // pred_region
        %s231 = smul.u32 16, %s20
        %p232 = scmp.lt.s32.totalorder %s19, 1
        %s233 = scalar_select %p232, %s19, 1
        %p234 = scmp.lt.s32.totalorder %s231, 15
        %s235 = scalar_select %p234, %s231, 15
        %s236 = smul.addr %s233, 16
        %s237 = sadd.s32 %s235, %s236
        %s238 = smul.addr %s237, 4
        %s239 = scalar_lea.vmem %s1, %s238
        %s240 = smul.u32 16, %s20
      $region40: #{vp2p_forward.3} parent=31 // pred_fallthru
        _
    $region32: #{vp2p_forward.3} parent=5 // pred_fallthru
      _
    %p241 = scmp.le.s32.totalorder 1, %s12
    %p242 = scmp.lt.s32.totalorder %s12, 3
    %p243 = pnand %p241, %p242
    %p244 = pneg %p243
    // Predicated region
    $region41: #{vp2p_forward.3} parent=5 // pred_check
      _
    $region42: #{vp2p_forward.3} parent=5 // pred_check_branch
      %246 = sbr.rel (%p243) target = $region44
    $region43: #{vp2p_forward.3} parent=5 // pred_region
      %s247 = ssub.s32 %s12, 1
      %p248 = scmp.lt.s32.totalorder %s21, 1
      %s249 = scalar_select %p248, %s21, 1
      %s250 = smul.addr %s249, 2
      %s251 = scalar_lea.vmem %s0, %s250
      %p252 = pneg %p50
      %p253 = pneg %p47
      %s254 = smul.u32 16, %s22
      %p255 = scmp.lt.s32.totalorder %s21, 1
      %s256 = scalar_select %p255, %s21, 1
      %p257 = scmp.lt.s32.totalorder %s254, 15
      %s258 = scalar_select %p257, %s254, 15
      %s259 = smul.addr %s256, 16
      %s260 = sadd.s32 %s258, %s259
      %s261 = smul.addr %s260, 4
      %s262 = scalar_lea.vmem %s1, %s261
      %p263 = pneg %p78
      %p264 = pneg %p75
      %p265 = pneg %p99
      %p266 = pneg %p96
      %p267 = pneg %p120
      %p268 = pneg %p117
      %p269 = pneg %p141
      %p270 = pneg %p138
      %p271 = pneg %p162
      %p272 = pneg %p159
      %p273 = pneg %p190
      %p274 = pneg %p187
      %s275 = smul.u32 16, %s22
      %p276 = scmp.lt.s32.totalorder %s21, 1
      %s277 = scalar_select %p276, %s21, 1
      %p278 = scmp.lt.s32.totalorder %s275, 15
      %s279 = scalar_select %p278, %s275, 15
      %s280 = smul.addr %s277, 16
      %s281 = sadd.s32 %s279, %s280
      %s282 = smul.addr %s281, 4
      %s283 = scalar_lea.vmem %s6, %s282
      %p284 = scmp.lt.s32.totalorder %s21, 1
      %s285 = scalar_select %p284, %s21, 1
      %s286 = smul.addr %s285, 2
      %s287 = scalar_lea.vmem %s0, %s286
      %s288 = smul.u32 16, %s22
      %p289 = scmp.lt.s32.totalorder %s21, 1
      %s290 = scalar_select %p289, %s21, 1
      %p291 = scmp.lt.s32.totalorder %s288, 15
      %s292 = scalar_select %p291, %s288, 15
      %s293 = smul.addr %s290, 16
      %s294 = sadd.s32 %s292, %s293
      %s295 = smul.addr %s294, 4
      %s296 = scalar_lea.vmem %s1, %s295
      %s297 = smul.u32 16, %s22
      %s298 = smul.u32 16, %s22
      %p299 = scmp.lt.s32.totalorder %s21, 1
      %s300 = scalar_select %p299, %s21, 1
      %p301 = scmp.lt.s32.totalorder %s298, 15
      %s302 = scalar_select %p301, %s298, 15
      %s303 = smul.addr %s300, 16
      %s304 = sadd.s32 %s302, %s303
      %s305 = smul.addr %s304, 4
      %s306 = scalar_lea.vmem %s6, %s305
      %s307 = smul.u32 16, %s22
      %v309 = vld [vmem:[%s296] sm:$0xf]
      %v310 = vld [vmem:[%s296 + $0x4] sm:$0xf]
      %v311 = vld [vmem:[%s296 + $0x8] sm:$0xf]
      %v312 = vld [vmem:[%s296 + $0xc] sm:$0xf]
      %v313 = vld [vmem:[%s296 + $0x10] sm:$0xf]
      %v314 = vld [vmem:[%s296 + $0x14] sm:$0xf]
      %v315 = vld [vmem:[%s296 + $0x18] sm:$0xf]
      %v316 = vld [vmem:[%s296 + $0x1c] sm:$0xf]
      %v317 = vld [vmem:[%s296 + $0x20] sm:$0xf]
      %v318 = vld [vmem:[%s296 + $0x24] sm:$0xf]
      %v319 = vld [vmem:[%s296 + $0x28] sm:$0xf]
      %v320 = vld [vmem:[%s296 + $0x2c] sm:$0xf]
      %v321 = vld [vmem:[%s296 + $0x30] sm:$0xf]
      %v322 = vld [vmem:[%s296 + $0x34] sm:$0xf]
      %v323 = vld [vmem:[%s296 + $0x38] sm:$0xf]
      %v324 = vld [vmem:[%s296 + $0x3c] sm:$0xf]
      %v325 = vld [vmem:[%s287] sm:$0x3]
      %v326 = vld [vmem:[%s2] sm:$0xff]
      %v327 = vld [vmem:[%s2 + $0x8] sm:$0xff]
      %v328 = vld [vmem:[%s2 + $0x10] sm:$0xff]
      %v329 = vld [vmem:[%s2 + $0x18] sm:$0xff]
      %v330 = vld [vmem:[%s2 + $0x20] sm:$0xff]
      %v331 = vld [vmem:[%s2 + $0x28] sm:$0xff]
      %v332 = vld [vmem:[%s2 + $0x30] sm:$0xff]
      %v333 = vld [vmem:[%s2 + $0x38] sm:$0xff]
      %v334 = vld [vmem:[%s2 + $0x40] sm:$0xff]
      %v335 = vld [vmem:[%s2 + $0x48] sm:$0xff]
      %v336 = vld [vmem:[%s2 + $0x50] sm:$0xff]
      %v337 = vld [vmem:[%s2 + $0x58] sm:$0xff]
      %v338 = vld [vmem:[%s2 + $0x60] sm:$0xff]
      %v339 = vld [vmem:[%s2 + $0x68] sm:$0xff]
      %v340 = vld [vmem:[%s2 + $0x70] sm:$0xff]
      %v341 = vld [vmem:[%s2 + $0x78] sm:$0xff]
      %v343 = vperm.slane %v325, 0
      %v344 = vperm.slane %v325, 1
      %v363 = vunpack.c.l.b16 %v309
      %v364 = vunpack.c.l.b16 %v310
      %v365 = vunpack.c.l.b16 %v311
      %v366 = vunpack.c.l.b16 %v312
      %v367 = vunpack.c.l.b16 %v313
      %v368 = vunpack.c.l.b16 %v314
      %v369 = vunpack.c.l.b16 %v315
      %v370 = vunpack.c.l.b16 %v316
      %v371 = vunpack.c.l.b16 %v317
      %v372 = vunpack.c.l.b16 %v318
      %v373 = vunpack.c.l.b16 %v319
      %v374 = vunpack.c.l.b16 %v320
      %v375 = vunpack.c.l.b16 %v321
      %v376 = vunpack.c.l.b16 %v322
      %v377 = vunpack.c.l.b16 %v323
      %v378 = vunpack.c.l.b16 %v324
      %v379 = vpack.c.b16 %v364, %v363
      %v380 = vpack.c.b16 %v366, %v365
      %v381 = vpack.c.b16 %v368, %v367
      %v382 = vpack.c.b16 %v370, %v369
      %v383 = vpack.c.b16 %v372, %v371
      %v384 = vpack.c.b16 %v374, %v373
      %v385 = vpack.c.b16 %v376, %v375
      %v386 = vpack.c.b16 %v378, %v377
      %v411 = vunpack.c.l.b16 %v326
      %v412 = vunpack.c.h.b16 %v326
      %v413 = vunpack.c.l.b16 %v327
      %v414 = vunpack.c.h.b16 %v327
      %v415 = vunpack.c.l.b16 %v328
      %v416 = vunpack.c.h.b16 %v328
      %v417 = vunpack.c.l.b16 %v329
      %v418 = vunpack.c.h.b16 %v329
      %v419 = vunpack.c.l.b16 %v330
      %v420 = vunpack.c.h.b16 %v330
      %v421 = vunpack.c.l.b16 %v331
      %v422 = vunpack.c.h.b16 %v331
      %v423 = vunpack.c.l.b16 %v332
      %v424 = vunpack.c.h.b16 %v332
      %v425 = vunpack.c.l.b16 %v333
      %v426 = vunpack.c.h.b16 %v333
      %v427 = vunpack.c.l.b16 %v334
      %v428 = vunpack.c.h.b16 %v334
      %v429 = vunpack.c.l.b16 %v335
      %v430 = vunpack.c.h.b16 %v335
      %v431 = vunpack.c.l.b16 %v336
      %v432 = vunpack.c.h.b16 %v336
      %v433 = vunpack.c.l.b16 %v337
      %v434 = vunpack.c.h.b16 %v337
      %v435 = vunpack.c.l.b16 %v338
      %v436 = vunpack.c.h.b16 %v338
      %v437 = vunpack.c.l.b16 %v339
      %v438 = vunpack.c.h.b16 %v339
      %v439 = vunpack.c.l.b16 %v340
      %v440 = vunpack.c.h.b16 %v340
      %v441 = vunpack.c.l.b16 %v341
      %v442 = vunpack.c.h.b16 %v341
      %v443 = vpack.c.b16 %v413, %v411
      %v444 = vpack.c.b16 %v414, %v412
      %v445 = vpack.c.b16 %v417, %v415
      %v446 = vpack.c.b16 %v418, %v416
      %v447 = vpack.c.b16 %v421, %v419
      %v448 = vpack.c.b16 %v422, %v420
      %v449 = vpack.c.b16 %v425, %v423
      %v450 = vpack.c.b16 %v426, %v424
      %v451 = vpack.c.b16 %v429, %v427
      %v452 = vpack.c.b16 %v430, %v428
      %v453 = vpack.c.b16 %v433, %v431
      %v454 = vpack.c.b16 %v434, %v432
      %v455 = vpack.c.b16 %v437, %v435
      %v456 = vpack.c.b16 %v438, %v436
      %v457 = vpack.c.b16 %v441, %v439
      %v458 = vpack.c.b16 %v442, %v440
      %475 = vmatpush.bf16.msra.mxu0 %v457
      %476 = vmatpush.bf16.msra.mxu0 %v455
      %477 = vmatpush.bf16.msra.mxu0 %v453
      %478 = vmatpush.bf16.msra.mxu0 %v451
      %479 = vmatpush.bf16.msra.mxu0 %v449
      %480 = vmatpush.bf16.msra.mxu0 %v447
      %481 = vmatpush.bf16.msra.mxu0 %v445
      %482 = vmatpush.bf16.msra.mxu0 %v443
      %483 = vmatmul.bf16.gmra.mxu0 %v379
      %v484 = vpop.f32.mrf.mxu0
      %v485 = vadd.f32 %v343, %v484
      %v486 = vpop.f32.mrf.mxu0
      %v487 = vadd.f32 %v343, %v486
      %488 = vmatmul.bf16.gmra.mxu0 %v380
      %v489 = vpop.f32.mrf.mxu0
      %v490 = vadd.f32 %v343, %v489
      %v491 = vpop.f32.mrf.mxu0
      %v492 = vadd.f32 %v343, %v491
      %493 = vmatmul.bf16.gmra.mxu0 %v381
      %v494 = vpop.f32.mrf.mxu0
      %v495 = vadd.f32 %v343, %v494
      %v496 = vpop.f32.mrf.mxu0
      %v497 = vadd.f32 %v343, %v496
      %498 = vmatmul.bf16.gmra.mxu0 %v382
      %v499 = vpop.f32.mrf.mxu0
      %v500 = vadd.f32 %v343, %v499
      %v501 = vpop.f32.mrf.mxu0
      %v502 = vadd.f32 %v343, %v501
      %503 = vmatmul.bf16.gmra.mxu0 %v383
      %v504 = vpop.f32.mrf.mxu0
      %v505 = vadd.f32 %v343, %v504
      %v506 = vpop.f32.mrf.mxu0
      %v507 = vadd.f32 %v343, %v506
      %508 = vmatmul.bf16.gmra.mxu0 %v384
      %v509 = vpop.f32.mrf.mxu0
      %v510 = vadd.f32 %v343, %v509
      %v511 = vpop.f32.mrf.mxu0
      %v512 = vadd.f32 %v343, %v511
      %513 = vmatmul.bf16.gmra.mxu0 %v385
      %v514 = vpop.f32.mrf.mxu0
      %v515 = vadd.f32 %v343, %v514
      %v516 = vpop.f32.mrf.mxu0
      %v517 = vadd.f32 %v343, %v516
      %518 = vmatmul.bf16.gmra.mxu0 %v386
      %v519 = vpop.f32.mrf.mxu0
      %v520 = vadd.f32 %v343, %v519
      %v521 = vpop.f32.mrf.mxu0
      %v522 = vadd.f32 %v343, %v521
      %523 = vdwg.mxu0
      %524 = vmatpush.bf16.msra.mxu0 %v458
      %525 = vmatpush.bf16.msra.mxu0 %v456
      %526 = vmatpush.bf16.msra.mxu0 %v454
      %527 = vmatpush.bf16.msra.mxu0 %v452
      %528 = vmatpush.bf16.msra.mxu0 %v450
      %529 = vmatpush.bf16.msra.mxu0 %v448
      %530 = vmatpush.bf16.msra.mxu0 %v446
      %531 = vmatpush.bf16.msra.mxu0 %v444
      %532 = vmatmul.bf16.gmra.mxu0 %v379
      %v533 = vpop.f32.mrf.mxu0
      %v534 = vadd.f32 %v344, %v533
      %v535 = vpop.f32.mrf.mxu0
      %v536 = vadd.f32 %v344, %v535
      %537 = vmatmul.bf16.gmra.mxu0 %v380
      %v538 = vpop.f32.mrf.mxu0
      %v539 = vadd.f32 %v344, %v538
      %v540 = vpop.f32.mrf.mxu0
      %v541 = vadd.f32 %v344, %v540
      %542 = vmatmul.bf16.gmra.mxu0 %v381
      %v543 = vpop.f32.mrf.mxu0
      %v544 = vadd.f32 %v344, %v543
      %v545 = vpop.f32.mrf.mxu0
      %v546 = vadd.f32 %v344, %v545
      %547 = vmatmul.bf16.gmra.mxu0 %v382
      %v548 = vpop.f32.mrf.mxu0
      %v549 = vadd.f32 %v344, %v548
      %v550 = vpop.f32.mrf.mxu0
      %v551 = vadd.f32 %v344, %v550
      %552 = vmatmul.bf16.gmra.mxu0 %v383
      %v553 = vpop.f32.mrf.mxu0
      %v554 = vadd.f32 %v344, %v553
      %v555 = vpop.f32.mrf.mxu0
      %v556 = vadd.f32 %v344, %v555
      %557 = vmatmul.bf16.gmra.mxu0 %v384
      %v558 = vpop.f32.mrf.mxu0
      %v559 = vadd.f32 %v344, %v558
      %v560 = vpop.f32.mrf.mxu0
      %v561 = vadd.f32 %v344, %v560
      %562 = vmatmul.bf16.gmra.mxu0 %v385
      %v563 = vpop.f32.mrf.mxu0
      %v564 = vadd.f32 %v344, %v563
      %v565 = vpop.f32.mrf.mxu0
      %v566 = vadd.f32 %v344, %v565
      %567 = vmatmul.bf16.gmra.mxu0 %v386
      %v568 = vpop.f32.mrf.mxu0
      %v569 = vadd.f32 %v344, %v568
      %v570 = vpop.f32.mrf.mxu0
      %v571 = vadd.f32 %v344, %v570
      %572 = vdwg.mxu0
      %v573 = vmax.f32 %v485, 0.0
      %v574 = vmax.f32 %v534, 0.0
      %v575 = vmax.f32 %v487, 0.0
      %v576 = vmax.f32 %v536, 0.0
      %v577 = vmax.f32 %v490, 0.0
      %v578 = vmax.f32 %v539, 0.0
      %v579 = vmax.f32 %v492, 0.0
      %v580 = vmax.f32 %v541, 0.0
      %v581 = vmax.f32 %v495, 0.0
      %v582 = vmax.f32 %v544, 0.0
      %v583 = vmax.f32 %v497, 0.0
      %v584 = vmax.f32 %v546, 0.0
      %v585 = vmax.f32 %v500, 0.0
      %v586 = vmax.f32 %v549, 0.0
      %v587 = vmax.f32 %v502, 0.0
      %v588 = vmax.f32 %v551, 0.0
      %v589 = vmax.f32 %v505, 0.0
      %v590 = vmax.f32 %v554, 0.0
      %v591 = vmax.f32 %v507, 0.0
      %v592 = vmax.f32 %v556, 0.0
      %v593 = vmax.f32 %v510, 0.0
      %v594 = vmax.f32 %v559, 0.0
      %v595 = vmax.f32 %v512, 0.0
      %v596 = vmax.f32 %v561, 0.0
      %v597 = vmax.f32 %v515, 0.0
      %v598 = vmax.f32 %v564, 0.0
      %v599 = vmax.f32 %v517, 0.0
      %v600 = vmax.f32 %v566, 0.0
      %v601 = vmax.f32 %v520, 0.0
      %v602 = vmax.f32 %v569, 0.0
      %v603 = vmax.f32 %v522, 0.0
      %v604 = vmax.f32 %v571, 0.0
      %v605 = vpack.c.bf16 %v575, %v573
      %v606 = vpack.c.bf16 %v576, %v574
      %v607 = vpack.c.bf16 %v579, %v577
      %v608 = vpack.c.bf16 %v580, %v578
      %v609 = vpack.c.bf16 %v583, %v581
      %v610 = vpack.c.bf16 %v584, %v582
      %v611 = vpack.c.bf16 %v587, %v585
      %v612 = vpack.c.bf16 %v588, %v586
      %v613 = vpack.c.bf16 %v591, %v589
      %v614 = vpack.c.bf16 %v592, %v590
      %v615 = vpack.c.bf16 %v595, %v593
      %v616 = vpack.c.bf16 %v596, %v594
      %v617 = vpack.c.bf16 %v599, %v597
      %v618 = vpack.c.bf16 %v600, %v598
      %v619 = vpack.c.bf16 %v603, %v601
      %v620 = vpack.c.bf16 %v604, %v602
      %v621 = vld [vmem:[%s3] sm:$0xff]
      %v622 = vld [vmem:[%s3 + $0x8] sm:$0xff]
      %v623 = vld [vmem:[%s3 + $0x10] sm:$0xff]
      %v624 = vld [vmem:[%s3 + $0x18] sm:$0xff]
      %v625 = vld [vmem:[%s3 + $0x20] sm:$0xff]
      %v626 = vld [vmem:[%s3 + $0x28] sm:$0xff]
      %v627 = vld [vmem:[%s3 + $0x30] sm:$0xff]
      %v628 = vld [vmem:[%s3 + $0x38] sm:$0xff]
      %v629 = vld [vmem:[%s3 + $0x40] sm:$0xff]
      %v630 = vld [vmem:[%s3 + $0x48] sm:$0xff]
      %v631 = vld [vmem:[%s3 + $0x50] sm:$0xff]
      %v632 = vld [vmem:[%s3 + $0x58] sm:$0xff]
      %v633 = vld [vmem:[%s3 + $0x60] sm:$0xff]
      %v634 = vld [vmem:[%s3 + $0x68] sm:$0xff]
      %v635 = vld [vmem:[%s3 + $0x70] sm:$0xff]
      %v636 = vld [vmem:[%s3 + $0x78] sm:$0xff]
      %v637 = vld [vmem:[%s3 + $0x80] sm:$0xff]
      %v638 = vld [vmem:[%s3 + $0x88] sm:$0xff]
      %v639 = vld [vmem:[%s3 + $0x90] sm:$0xff]
      %v640 = vld [vmem:[%s3 + $0x98] sm:$0xff]
      %v641 = vld [vmem:[%s3 + $0xa0] sm:$0xff]
      %v642 = vld [vmem:[%s3 + $0xa8] sm:$0xff]
      %v643 = vld [vmem:[%s3 + $0xb0] sm:$0xff]
      %v644 = vld [vmem:[%s3 + $0xb8] sm:$0xff]
      %v645 = vld [vmem:[%s3 + $0xc0] sm:$0xff]
      %v646 = vld [vmem:[%s3 + $0xc8] sm:$0xff]
      %v647 = vld [vmem:[%s3 + $0xd0] sm:$0xff]
      %v648 = vld [vmem:[%s3 + $0xd8] sm:$0xff]
      %v649 = vld [vmem:[%s3 + $0xe0] sm:$0xff]
      %v650 = vld [vmem:[%s3 + $0xe8] sm:$0xff]
      %v651 = vld [vmem:[%s3 + $0xf0] sm:$0xff]
      %v652 = vld [vmem:[%s3 + $0xf8] sm:$0xff]
      %v653 = vld [vmem:[%s4] sm:$0x3]
      %v655 = vperm.slane %v653, 0
      %v656 = vperm.slane %v653, 1
      %v691 = vunpack.c.l.b16 %v621
      %v692 = vunpack.c.h.b16 %v621
      %v693 = vunpack.c.l.b16 %v622
      %v694 = vunpack.c.h.b16 %v622
      %v695 = vunpack.c.l.b16 %v623
      %v696 = vunpack.c.h.b16 %v623
      %v697 = vunpack.c.l.b16 %v624
      %v698 = vunpack.c.h.b16 %v624
      %v699 = vunpack.c.l.b16 %v625
      %v700 = vunpack.c.h.b16 %v625
      %v701 = vunpack.c.l.b16 %v626
      %v702 = vunpack.c.h.b16 %v626
      %v703 = vunpack.c.l.b16 %v627
      %v704 = vunpack.c.h.b16 %v627
      %v705 = vunpack.c.l.b16 %v628
      %v706 = vunpack.c.h.b16 %v628
      %v707 = vunpack.c.l.b16 %v629
      %v708 = vunpack.c.h.b16 %v629
      %v709 = vunpack.c.l.b16 %v630
      %v710 = vunpack.c.h.b16 %v630
      %v711 = vunpack.c.l.b16 %v631
      %v712 = vunpack.c.h.b16 %v631
      %v713 = vunpack.c.l.b16 %v632
      %v714 = vunpack.c.h.b16 %v632
      %v715 = vunpack.c.l.b16 %v633
      %v716 = vunpack.c.h.b16 %v633
      %v717 = vunpack.c.l.b16 %v634
      %v718 = vunpack.c.h.b16 %v634
      %v719 = vunpack.c.l.b16 %v635
      %v720 = vunpack.c.h.b16 %v635
      %v721 = vunpack.c.l.b16 %v636
      %v722 = vunpack.c.h.b16 %v636
      %v723 = vunpack.c.l.b16 %v637
      %v724 = vunpack.c.h.b16 %v637
      %v725 = vunpack.c.l.b16 %v638
      %v726 = vunpack.c.h.b16 %v638
      %v727 = vunpack.c.l.b16 %v639
      %v728 = vunpack.c.h.b16 %v639
      %v729 = vunpack.c.l.b16 %v640
      %v730 = vunpack.c.h.b16 %v640
      %v731 = vunpack.c.l.b16 %v641
      %v732 = vunpack.c.h.b16 %v641
      %v733 = vunpack.c.l.b16 %v642
      %v734 = vunpack.c.h.b16 %v642
      %v735 = vunpack.c.l.b16 %v643
      %v736 = vunpack.c.h.b16 %v643
      %v737 = vunpack.c.l.b16 %v644
      %v738 = vunpack.c.h.b16 %v644
      %v739 = vunpack.c.l.b16 %v645
      %v740 = vunpack.c.h.b16 %v645
      %v741 = vunpack.c.l.b16 %v646
      %v742 = vunpack.c.h.b16 %v646
      %v743 = vunpack.c.l.b16 %v647
      %v744 = vunpack.c.h.b16 %v647
      %v745 = vunpack.c.l.b16 %v648
      %v746 = vunpack.c.h.b16 %v648
      %v747 = vunpack.c.l.b16 %v649
      %v748 = vunpack.c.h.b16 %v649
      %v749 = vunpack.c.l.b16 %v650
      %v750 = vunpack.c.h.b16 %v650
      %v751 = vunpack.c.l.b16 %v651
      %v752 = vunpack.c.h.b16 %v651
      %v753 = vunpack.c.l.b16 %v652
      %v754 = vunpack.c.h.b16 %v652
      %v755 = vpack.c.b16 %v693, %v691
      %v756 = vpack.c.b16 %v694, %v692
      %v757 = vpack.c.b16 %v697, %v695
      %v758 = vpack.c.b16 %v698, %v696
      %v759 = vpack.c.b16 %v701, %v699
      %v760 = vpack.c.b16 %v702, %v700
      %v761 = vpack.c.b16 %v705, %v703
      %v762 = vpack.c.b16 %v706, %v704
      %v763 = vpack.c.b16 %v709, %v707
      %v764 = vpack.c.b16 %v710, %v708
      %v765 = vpack.c.b16 %v713, %v711
      %v766 = vpack.c.b16 %v714, %v712
      %v767 = vpack.c.b16 %v717, %v715
      %v768 = vpack.c.b16 %v718, %v716
      %v769 = vpack.c.b16 %v721, %v719
      %v770 = vpack.c.b16 %v722, %v720
      %v771 = vpack.c.b16 %v725, %v723
      %v772 = vpack.c.b16 %v726, %v724
      %v773 = vpack.c.b16 %v729, %v727
      %v774 = vpack.c.b16 %v730, %v728
      %v775 = vpack.c.b16 %v733, %v731
      %v776 = vpack.c.b16 %v734, %v732
      %v777 = vpack.c.b16 %v737, %v735
      %v778 = vpack.c.b16 %v738, %v736
      %v779 = vpack.c.b16 %v741, %v739
      %v780 = vpack.c.b16 %v742, %v740
      %v781 = vpack.c.b16 %v745, %v743
      %v782 = vpack.c.b16 %v746, %v744
      %v783 = vpack.c.b16 %v749, %v747
      %v784 = vpack.c.b16 %v750, %v748
      %v785 = vpack.c.b16 %v753, %v751
      %v786 = vpack.c.b16 %v754, %v752
      %819 = vmatpush.bf16.msra.mxu0 %v769
      %820 = vmatpush.bf16.msra.mxu0 %v767
      %821 = vmatpush.bf16.msra.mxu0 %v765
      %822 = vmatpush.bf16.msra.mxu0 %v763
      %823 = vmatpush.bf16.msra.mxu0 %v761
      %824 = vmatpush.bf16.msra.mxu0 %v759
      %825 = vmatpush.bf16.msra.mxu0 %v757
      %826 = vmatpush.bf16.msra.mxu0 %v755
      %827 = vmatmul.bf16.gmra.mxu0 %v605
      %v828 = vpop.f32.mrf.mxu0
      %v829 = vadd.f32 %v655, %v828
      %v830 = vpop.f32.mrf.mxu0
      %v831 = vadd.f32 %v655, %v830
      %832 = vmatmul.bf16.gmra.mxu0 %v607
      %v833 = vpop.f32.mrf.mxu0
      %v834 = vadd.f32 %v655, %v833
      %v835 = vpop.f32.mrf.mxu0
      %v836 = vadd.f32 %v655, %v835
      %837 = vmatmul.bf16.gmra.mxu0 %v609
      %v838 = vpop.f32.mrf.mxu0
      %v839 = vadd.f32 %v655, %v838
      %v840 = vpop.f32.mrf.mxu0
      %v841 = vadd.f32 %v655, %v840
      %842 = vmatmul.bf16.gmra.mxu0 %v611
      %v843 = vpop.f32.mrf.mxu0
      %v844 = vadd.f32 %v655, %v843
      %v845 = vpop.f32.mrf.mxu0
      %v846 = vadd.f32 %v655, %v845
      %847 = vmatmul.bf16.gmra.mxu0 %v613
      %v848 = vpop.f32.mrf.mxu0
      %v849 = vadd.f32 %v655, %v848
      %v850 = vpop.f32.mrf.mxu0
      %v851 = vadd.f32 %v655, %v850
      %852 = vmatmul.bf16.gmra.mxu0 %v615
      %v853 = vpop.f32.mrf.mxu0
      %v854 = vadd.f32 %v655, %v853
      %v855 = vpop.f32.mrf.mxu0
      %v856 = vadd.f32 %v655, %v855
      %857 = vmatmul.bf16.gmra.mxu0 %v617
      %v858 = vpop.f32.mrf.mxu0
      %v859 = vadd.f32 %v655, %v858
      %v860 = vpop.f32.mrf.mxu0
      %v861 = vadd.f32 %v655, %v860
      %862 = vmatmul.bf16.gmra.mxu0 %v619
      %v863 = vpop.f32.mrf.mxu0
      %v864 = vadd.f32 %v655, %v863
      %v865 = vpop.f32.mrf.mxu0
      %v866 = vadd.f32 %v655, %v865
      %867 = vdwg.mxu0
      %868 = vmatpush.bf16.msra.mxu0 %v785
      %869 = vmatpush.bf16.msra.mxu0 %v783
      %870 = vmatpush.bf16.msra.mxu0 %v781
      %871 = vmatpush.bf16.msra.mxu0 %v779
      %872 = vmatpush.bf16.msra.mxu0 %v777
      %873 = vmatpush.bf16.msra.mxu0 %v775
      %874 = vmatpush.bf16.msra.mxu0 %v773
      %875 = vmatpush.bf16.msra.mxu0 %v771
      %876 = vmatmul.bf16.gmra.mxu0 %v606
      %v877 = vpop.f32.mrf.mxu0
      %v878 = vadd.f32 %v829, %v877
      %v879 = vpop.f32.mrf.mxu0
      %v880 = vadd.f32 %v831, %v879
      %881 = vmatmul.bf16.gmra.mxu0 %v608
      %v882 = vpop.f32.mrf.mxu0
      %v883 = vadd.f32 %v834, %v882
      %v884 = vpop.f32.mrf.mxu0
      %v885 = vadd.f32 %v836, %v884
      %886 = vmatmul.bf16.gmra.mxu0 %v610
      %v887 = vpop.f32.mrf.mxu0
      %v888 = vadd.f32 %v839, %v887
      %v889 = vpop.f32.mrf.mxu0
      %v890 = vadd.f32 %v841, %v889
      %891 = vmatmul.bf16.gmra.mxu0 %v612
      %v892 = vpop.f32.mrf.mxu0
      %v893 = vadd.f32 %v844, %v892
      %v894 = vpop.f32.mrf.mxu0
      %v895 = vadd.f32 %v846, %v894
      %896 = vmatmul.bf16.gmra.mxu0 %v614
      %v897 = vpop.f32.mrf.mxu0
      %v898 = vadd.f32 %v849, %v897
      %v899 = vpop.f32.mrf.mxu0
      %v900 = vadd.f32 %v851, %v899
      %901 = vmatmul.bf16.gmra.mxu0 %v616
      %v902 = vpop.f32.mrf.mxu0
      %v903 = vadd.f32 %v854, %v902
      %v904 = vpop.f32.mrf.mxu0
      %v905 = vadd.f32 %v856, %v904
      %906 = vmatmul.bf16.gmra.mxu0 %v618
      %v907 = vpop.f32.mrf.mxu0
      %v908 = vadd.f32 %v859, %v907
      %v909 = vpop.f32.mrf.mxu0
      %v910 = vadd.f32 %v861, %v909
      %911 = vmatmul.bf16.gmra.mxu0 %v620
      %v912 = vpop.f32.mrf.mxu0
      %v913 = vadd.f32 %v864, %v912
      %v914 = vpop.f32.mrf.mxu0
      %v915 = vadd.f32 %v866, %v914
      %916 = vdwg.mxu0
      %917 = vmatpush.bf16.msra.mxu0 %v770
      %918 = vmatpush.bf16.msra.mxu0 %v768
      %919 = vmatpush.bf16.msra.mxu0 %v766
      %920 = vmatpush.bf16.msra.mxu0 %v764
      %921 = vmatpush.bf16.msra.mxu0 %v762
      %922 = vmatpush.bf16.msra.mxu0 %v760
      %923 = vmatpush.bf16.msra.mxu0 %v758
      %924 = vmatpush.bf16.msra.mxu0 %v756
      %925 = vmatmul.bf16.gmra.mxu0 %v605
      %v926 = vpop.f32.mrf.mxu0
      %v927 = vadd.f32 %v656, %v926
      %v928 = vpop.f32.mrf.mxu0
      %v929 = vadd.f32 %v656, %v928
      %930 = vmatmul.bf16.gmra.mxu0 %v607
      %v931 = vpop.f32.mrf.mxu0
      %v932 = vadd.f32 %v656, %v931
      %v933 = vpop.f32.mrf.mxu0
      %v934 = vadd.f32 %v656, %v933
      %935 = vmatmul.bf16.gmra.mxu0 %v609
      %v936 = vpop.f32.mrf.mxu0
      %v937 = vadd.f32 %v656, %v936
      %v938 = vpop.f32.mrf.mxu0
      %v939 = vadd.f32 %v656, %v938
      %940 = vmatmul.bf16.gmra.mxu0 %v611
      %v941 = vpop.f32.mrf.mxu0
      %v942 = vadd.f32 %v656, %v941
      %v943 = vpop.f32.mrf.mxu0
      %v944 = vadd.f32 %v656, %v943
      %945 = vmatmul.bf16.gmra.mxu0 %v613
      %v946 = vpop.f32.mrf.mxu0
      %v947 = vadd.f32 %v656, %v946
      %v948 = vpop.f32.mrf.mxu0
      %v949 = vadd.f32 %v656, %v948
      %950 = vmatmul.bf16.gmra.mxu0 %v615
      %v951 = vpop.f32.mrf.mxu0
      %v952 = vadd.f32 %v656, %v951
      %v953 = vpop.f32.mrf.mxu0
      %v954 = vadd.f32 %v656, %v953
      %955 = vmatmul.bf16.gmra.mxu0 %v617
      %v956 = vpop.f32.mrf.mxu0
      %v957 = vadd.f32 %v656, %v956
      %v958 = vpop.f32.mrf.mxu0
      %v959 = vadd.f32 %v656, %v958
      %960 = vmatmul.bf16.gmra.mxu0 %v619
      %v961 = vpop.f32.mrf.mxu0
      %v962 = vadd.f32 %v656, %v961
      %v963 = vpop.f32.mrf.mxu0
      %v964 = vadd.f32 %v656, %v963
      %965 = vdwg.mxu0
      %966 = vmatpush.bf16.msra.mxu0 %v786
      %967 = vmatpush.bf16.msra.mxu0 %v784
      %968 = vmatpush.bf16.msra.mxu0 %v782
      %969 = vmatpush.bf16.msra.mxu0 %v780
      %970 = vmatpush.bf16.msra.mxu0 %v778
      %971 = vmatpush.bf16.msra.mxu0 %v776
      %972 = vmatpush.bf16.msra.mxu0 %v774
      %973 = vmatpush.bf16.msra.mxu0 %v772
      %974 = vmatmul.bf16.gmra.mxu0 %v606
      %v975 = vpop.f32.mrf.mxu0
      %v976 = vadd.f32 %v927, %v975
      %v977 = vpop.f32.mrf.mxu0
      %v978 = vadd.f32 %v929, %v977
      %979 = vmatmul.bf16.gmra.mxu0 %v608
      %v980 = vpop.f32.mrf.mxu0
      %v981 = vadd.f32 %v932, %v980
      %v982 = vpop.f32.mrf.mxu0
      %v983 = vadd.f32 %v934, %v982
      %984 = vmatmul.bf16.gmra.mxu0 %v610
      %v985 = vpop.f32.mrf.mxu0
      %v986 = vadd.f32 %v937, %v985
      %v987 = vpop.f32.mrf.mxu0
      %v988 = vadd.f32 %v939, %v987
      %989 = vmatmul.bf16.gmra.mxu0 %v612
      %v990 = vpop.f32.mrf.mxu0
      %v991 = vadd.f32 %v942, %v990
      %v992 = vpop.f32.mrf.mxu0
      %v993 = vadd.f32 %v944, %v992
      %994 = vmatmul.bf16.gmra.mxu0 %v614
      %v995 = vpop.f32.mrf.mxu0
      %v996 = vadd.f32 %v947, %v995
      %v997 = vpop.f32.mrf.mxu0
      %v998 = vadd.f32 %v949, %v997
      %999 = vmatmul.bf16.gmra.mxu0 %v616
      %v1000 = vpop.f32.mrf.mxu0
      %v1001 = vadd.f32 %v952, %v1000
      %v1002 = vpop.f32.mrf.mxu0
      %v1003 = vadd.f32 %v954, %v1002
      %1004 = vmatmul.bf16.gmra.mxu0 %v618
      %v1005 = vpop.f32.mrf.mxu0
      %v1006 = vadd.f32 %v957, %v1005
      %v1007 = vpop.f32.mrf.mxu0
      %v1008 = vadd.f32 %v959, %v1007
      %1009 = vmatmul.bf16.gmra.mxu0 %v620
      %v1010 = vpop.f32.mrf.mxu0
      %v1011 = vadd.f32 %v962, %v1010
      %v1012 = vpop.f32.mrf.mxu0
      %v1013 = vadd.f32 %v964, %v1012
      %1014 = vdwg.mxu0
      %v1015 = vmax.f32 %v878, 0.0
      %v1016 = vmax.f32 %v976, 0.0
      %v1017 = vmax.f32 %v880, 0.0
      %v1018 = vmax.f32 %v978, 0.0
      %v1019 = vmax.f32 %v883, 0.0
      %v1020 = vmax.f32 %v981, 0.0
      %v1021 = vmax.f32 %v885, 0.0
      %v1022 = vmax.f32 %v983, 0.0
      %v1023 = vmax.f32 %v888, 0.0
      %v1024 = vmax.f32 %v986, 0.0
      %v1025 = vmax.f32 %v890, 0.0
      %v1026 = vmax.f32 %v988, 0.0
      %v1027 = vmax.f32 %v893, 0.0
      %v1028 = vmax.f32 %v991, 0.0
      %v1029 = vmax.f32 %v895, 0.0
      %v1030 = vmax.f32 %v993, 0.0
      %v1031 = vmax.f32 %v898, 0.0
      %v1032 = vmax.f32 %v996, 0.0
      %v1033 = vmax.f32 %v900, 0.0
      %v1034 = vmax.f32 %v998, 0.0
      %v1035 = vmax.f32 %v903, 0.0
      %v1036 = vmax.f32 %v1001, 0.0
      %v1037 = vmax.f32 %v905, 0.0
      %v1038 = vmax.f32 %v1003, 0.0
      %v1039 = vmax.f32 %v908, 0.0
      %v1040 = vmax.f32 %v1006, 0.0
      %v1041 = vmax.f32 %v910, 0.0
      %v1042 = vmax.f32 %v1008, 0.0
      %v1043 = vmax.f32 %v913, 0.0
      %v1044 = vmax.f32 %v1011, 0.0
      %v1045 = vmax.f32 %v915, 0.0
      %v1046 = vmax.f32 %v1013, 0.0
      %v1047 = vpack.c.bf16 %v1017, %v1015
      %v1048 = vpack.c.bf16 %v1018, %v1016
      %v1049 = vpack.c.bf16 %v1021, %v1019
      %v1050 = vpack.c.bf16 %v1022, %v1020
      %v1051 = vpack.c.bf16 %v1025, %v1023
      %v1052 = vpack.c.bf16 %v1026, %v1024
      %v1053 = vpack.c.bf16 %v1029, %v1027
      %v1054 = vpack.c.bf16 %v1030, %v1028
      %v1055 = vpack.c.bf16 %v1033, %v1031
      %v1056 = vpack.c.bf16 %v1034, %v1032
      %v1057 = vpack.c.bf16 %v1037, %v1035
      %v1058 = vpack.c.bf16 %v1038, %v1036
      %v1059 = vpack.c.bf16 %v1041, %v1039
      %v1060 = vpack.c.bf16 %v1042, %v1040
      %v1061 = vpack.c.bf16 %v1045, %v1043
      %v1062 = vpack.c.bf16 %v1046, %v1044
      %v1063 = vld [vmem:[%s5] sm:$0xf]
      %v1064 = vld [vmem:[%s5 + $0x4] sm:$0xf]
      %v1065 = vld [vmem:[%s5 + $0x8] sm:$0xf]
      %v1066 = vld [vmem:[%s5 + $0xc] sm:$0xf]
      %v1067 = vld [vmem:[%s5 + $0x10] sm:$0xf]
      %v1068 = vld [vmem:[%s5 + $0x14] sm:$0xf]
      %v1069 = vld [vmem:[%s5 + $0x18] sm:$0xf]
      %v1070 = vld [vmem:[%s5 + $0x1c] sm:$0xf]
      %v1071 = vld [vmem:[%s5 + $0x20] sm:$0xf]
      %v1072 = vld [vmem:[%s5 + $0x24] sm:$0xf]
      %v1073 = vld [vmem:[%s5 + $0x28] sm:$0xf]
      %v1074 = vld [vmem:[%s5 + $0x2c] sm:$0xf]
      %v1075 = vld [vmem:[%s5 + $0x30] sm:$0xf]
      %v1076 = vld [vmem:[%s5 + $0x34] sm:$0xf]
      %v1077 = vld [vmem:[%s5 + $0x38] sm:$0xf]
      %v1078 = vld [vmem:[%s5 + $0x3c] sm:$0xf]
      %v1079 = vld [vmem:[%s5 + $0x40] sm:$0xf]
      %v1080 = vld [vmem:[%s5 + $0x44] sm:$0xf]
      %v1081 = vld [vmem:[%s5 + $0x48] sm:$0xf]
      %v1082 = vld [vmem:[%s5 + $0x4c] sm:$0xf]
      %v1083 = vld [vmem:[%s5 + $0x50] sm:$0xf]
      %v1084 = vld [vmem:[%s5 + $0x54] sm:$0xf]
      %v1085 = vld [vmem:[%s5 + $0x58] sm:$0xf]
      %v1086 = vld [vmem:[%s5 + $0x5c] sm:$0xf]
      %v1111 = vunpack.c.l.b16 %v1063
      %v1112 = vunpack.c.l.b16 %v1064
      %v1113 = vunpack.c.l.b16 %v1065
      %v1114 = vunpack.c.l.b16 %v1066
      %v1115 = vunpack.c.l.b16 %v1067
      %v1116 = vunpack.c.l.b16 %v1068
      %v1117 = vunpack.c.l.b16 %v1069
      %v1118 = vunpack.c.l.b16 %v1070
      %v1119 = vunpack.c.l.b16 %v1071
      %v1120 = vunpack.c.l.b16 %v1072
      %v1121 = vunpack.c.l.b16 %v1073
      %v1122 = vunpack.c.l.b16 %v1074
      %v1123 = vunpack.c.l.b16 %v1075
      %v1124 = vunpack.c.l.b16 %v1076
      %v1125 = vunpack.c.l.b16 %v1077
      %v1126 = vunpack.c.l.b16 %v1078
      %v1127 = vunpack.c.l.b16 %v1079
      %v1128 = vunpack.c.l.b16 %v1080
      %v1129 = vunpack.c.l.b16 %v1081
      %v1130 = vunpack.c.l.b16 %v1082
      %v1131 = vunpack.c.l.b16 %v1083
      %v1132 = vunpack.c.l.b16 %v1084
      %v1133 = vunpack.c.l.b16 %v1085
      %v1134 = vunpack.c.l.b16 %v1086
      %v1135 = vpack.c.b16 %v1112, %v1111
      %v1136 = vpack.c.b16 %v1114, %v1113
      %v1137 = vpack.c.b16 %v1116, %v1115
      %v1138 = vpack.c.b16 %v1118, %v1117
      %v1139 = vpack.c.b16 %v1120, %v1119
      %v1140 = vpack.c.b16 %v1122, %v1121
      %v1141 = vpack.c.b16 %v1124, %v1123
      %v1142 = vpack.c.b16 %v1126, %v1125
      %v1143 = vpack.c.b16 %v1128, %v1127
      %v1144 = vpack.c.b16 %v1130, %v1129
      %v1145 = vpack.c.b16 %v1132, %v1131
      %v1146 = vpack.c.b16 %v1134, %v1133
      %vm1159 = vcmask 523264
      %v1161 = vsel %vm1159, %v1048, 0
      %v1164 = vsel %vm1159, %v1050, 0
      %v1167 = vsel %vm1159, %v1052, 0
      %v1170 = vsel %vm1159, %v1054, 0
      %v1173 = vsel %vm1159, %v1056, 0
      %v1176 = vsel %vm1159, %v1058, 0
      %v1179 = vsel %vm1159, %v1060, 0
      %v1182 = vsel %vm1159, %v1062, 0
      %1184 = vmatpush.bf16.msra.mxu0 %v1142
      %1185 = vmatpush.bf16.msra.mxu0 %v1141
      %1186 = vmatpush.bf16.msra.mxu0 %v1140
      %1187 = vmatpush.bf16.msra.mxu0 %v1139
      %1188 = vmatpush.bf16.msra.mxu0 %v1138
      %1189 = vmatpush.bf16.msra.mxu0 %v1137
      %1190 = vmatpush.bf16.msra.mxu0 %v1136
      %1191 = vmatpush.bf16.msra.mxu0 %v1135
      %1192 = vmatmul.bf16.gmra.mxu0 %v1047
      %v1193 = vpop.f32.mrf.mxu0
      %v1194 = vadd.f32 0.0, %v1193
      %v1195 = vpop.f32.mrf.mxu0
      %v1196 = vadd.f32 0.0, %v1195
      %1197 = vmatmul.bf16.gmra.mxu0 %v1049
      %v1198 = vpop.f32.mrf.mxu0
      %v1199 = vadd.f32 0.0, %v1198
      %v1200 = vpop.f32.mrf.mxu0
      %v1201 = vadd.f32 0.0, %v1200
      %1202 = vmatmul.bf16.gmra.mxu0 %v1051
      %v1203 = vpop.f32.mrf.mxu0
      %v1204 = vadd.f32 0.0, %v1203
      %v1205 = vpop.f32.mrf.mxu0
      %v1206 = vadd.f32 0.0, %v1205
      %1207 = vmatmul.bf16.gmra.mxu0 %v1053
      %v1208 = vpop.f32.mrf.mxu0
      %v1209 = vadd.f32 0.0, %v1208
      %v1210 = vpop.f32.mrf.mxu0
      %v1211 = vadd.f32 0.0, %v1210
      %1212 = vmatmul.bf16.gmra.mxu0 %v1055
      %v1213 = vpop.f32.mrf.mxu0
      %v1214 = vadd.f32 0.0, %v1213
      %v1215 = vpop.f32.mrf.mxu0
      %v1216 = vadd.f32 0.0, %v1215
      %1217 = vmatmul.bf16.gmra.mxu0 %v1057
      %v1218 = vpop.f32.mrf.mxu0
      %v1219 = vadd.f32 0.0, %v1218
      %v1220 = vpop.f32.mrf.mxu0
      %v1221 = vadd.f32 0.0, %v1220
      %1222 = vmatmul.bf16.gmra.mxu0 %v1059
      %v1223 = vpop.f32.mrf.mxu0
      %v1224 = vadd.f32 0.0, %v1223
      %v1225 = vpop.f32.mrf.mxu0
      %v1226 = vadd.f32 0.0, %v1225
      %1227 = vmatmul.bf16.gmra.mxu0 %v1061
      %v1228 = vpop.f32.mrf.mxu0
      %v1229 = vadd.f32 0.0, %v1228
      %v1230 = vpop.f32.mrf.mxu0
      %v1231 = vadd.f32 0.0, %v1230
      %1232 = vdwg.mxu0
      %1233 = vmatpush.bf16.msra.mxu0 0
      %1234 = vmatpush.bf16.msra.mxu0 0
      %1235 = vmatpush.bf16.msra.mxu0 0
      %1236 = vmatpush.bf16.msra.mxu0 0
      %1237 = vmatpush.bf16.msra.mxu0 %v1146
      %1238 = vmatpush.bf16.msra.mxu0 %v1145
      %1239 = vmatpush.bf16.msra.mxu0 %v1144
      %1240 = vmatpush.bf16.msra.mxu0 %v1143
      %1241 = vmatmul.bf16.gmra.mxu0 %v1161
      %v1242 = vpop.f32.mrf.mxu0
      %v1243 = vadd.f32 %v1194, %v1242
      %v1244 = vpop.f32.mrf.mxu0
      %v1245 = vadd.f32 %v1196, %v1244
      %1246 = vmatmul.bf16.gmra.mxu0 %v1164
      %v1247 = vpop.f32.mrf.mxu0
      %v1248 = vadd.f32 %v1199, %v1247
      %v1249 = vpop.f32.mrf.mxu0
      %v1250 = vadd.f32 %v1201, %v1249
      %1251 = vmatmul.bf16.gmra.mxu0 %v1167
      %v1252 = vpop.f32.mrf.mxu0
      %v1253 = vadd.f32 %v1204, %v1252
      %v1254 = vpop.f32.mrf.mxu0
      %v1255 = vadd.f32 %v1206, %v1254
      %1256 = vmatmul.bf16.gmra.mxu0 %v1170
      %v1257 = vpop.f32.mrf.mxu0
      %v1258 = vadd.f32 %v1209, %v1257
      %v1259 = vpop.f32.mrf.mxu0
      %v1260 = vadd.f32 %v1211, %v1259
      %1261 = vmatmul.bf16.gmra.mxu0 %v1173
      %v1262 = vpop.f32.mrf.mxu0
      %v1263 = vadd.f32 %v1214, %v1262
      %v1264 = vpop.f32.mrf.mxu0
      %v1265 = vadd.f32 %v1216, %v1264
      %1266 = vmatmul.bf16.gmra.mxu0 %v1176
      %v1267 = vpop.f32.mrf.mxu0
      %v1268 = vadd.f32 %v1219, %v1267
      %v1269 = vpop.f32.mrf.mxu0
      %v1270 = vadd.f32 %v1221, %v1269
      %1271 = vmatmul.bf16.gmra.mxu0 %v1179
      %v1272 = vpop.f32.mrf.mxu0
      %v1273 = vadd.f32 %v1224, %v1272
      %v1274 = vpop.f32.mrf.mxu0
      %v1275 = vadd.f32 %v1226, %v1274
      %1276 = vmatmul.bf16.gmra.mxu0 %v1182
      %v1277 = vpop.f32.mrf.mxu0
      %v1278 = vadd.f32 %v1229, %v1277
      %v1279 = vpop.f32.mrf.mxu0
      %v1280 = vadd.f32 %v1231, %v1279
      %1281 = vdwg.mxu0
      %v1282 = vlaneseq
      %v1283 = vand.u32 %v1282, 127
      %vm1284 = vcmp.lt.s32.totalorder %v1283, 64
      %v1285 = vmul.f32 %v1243, %v1243
      %v1286 = vmul.f32 %v1245, %v1245
      %v1287 = vmul.f32 %v1248, %v1248
      %v1288 = vmul.f32 %v1250, %v1250
      %v1289 = vmul.f32 %v1253, %v1253
      %v1290 = vmul.f32 %v1255, %v1255
      %v1291 = vmul.f32 %v1258, %v1258
      %v1292 = vmul.f32 %v1260, %v1260
      %v1293 = vmul.f32 %v1263, %v1263
      %v1294 = vmul.f32 %v1265, %v1265
      %v1295 = vmul.f32 %v1268, %v1268
      %v1296 = vmul.f32 %v1270, %v1270
      %v1297 = vmul.f32 %v1273, %v1273
      %v1298 = vmul.f32 %v1275, %v1275
      %v1299 = vmul.f32 %v1278, %v1278
      %v1300 = vmul.f32 %v1280, %v1280
      %v1301 = vsel %vm1284, %v1285, 0.0
      %v1302 = vsel %vm1284, %v1286, 0.0
      %v1303 = vsel %vm1284, %v1287, 0.0
      %v1304 = vsel %vm1284, %v1288, 0.0
      %v1305 = vsel %vm1284, %v1289, 0.0
      %v1306 = vsel %vm1284, %v1290, 0.0
      %v1307 = vsel %vm1284, %v1291, 0.0
      %v1308 = vsel %vm1284, %v1292, 0.0
      %v1309 = vsel %vm1284, %v1293, 0.0
      %v1310 = vsel %vm1284, %v1294, 0.0
      %v1311 = vsel %vm1284, %v1295, 0.0
      %v1312 = vsel %vm1284, %v1296, 0.0
      %v1313 = vsel %vm1284, %v1297, 0.0
      %v1314 = vsel %vm1284, %v1298, 0.0
      %v1315 = vsel %vm1284, %v1299, 0.0
      %v1316 = vsel %vm1284, %v1300, 0.0
      %1317 = vadd.xlane.f32.xlu0 %v1301
      %v1318 = vpop.xlane.xlu0 %1317
      %1319 = vadd.xlane.f32.xlu0 %v1302
      %v1320 = vpop.xlane.xlu0 %1319
      %1321 = vadd.xlane.f32.xlu0 %v1303
      %v1322 = vpop.xlane.xlu0 %1321
      %1323 = vadd.xlane.f32.xlu0 %v1304
      %v1324 = vpop.xlane.xlu0 %1323
      %1325 = vadd.xlane.f32.xlu0 %v1305
      %v1326 = vpop.xlane.xlu0 %1325
      %1327 = vadd.xlane.f32.xlu0 %v1306
      %v1328 = vpop.xlane.xlu0 %1327
      %1329 = vadd.xlane.f32.xlu0 %v1307
      %v1330 = vpop.xlane.xlu0 %1329
      %1331 = vadd.xlane.f32.xlu0 %v1308
      %v1332 = vpop.xlane.xlu0 %1331
      %1333 = vadd.xlane.f32.xlu0 %v1309
      %v1334 = vpop.xlane.xlu0 %1333
      %1335 = vadd.xlane.f32.xlu0 %v1310
      %v1336 = vpop.xlane.xlu0 %1335
      %1337 = vadd.xlane.f32.xlu0 %v1311
      %v1338 = vpop.xlane.xlu0 %1337
      %1339 = vadd.xlane.f32.xlu0 %v1312
      %v1340 = vpop.xlane.xlu0 %1339
      %1341 = vadd.xlane.f32.xlu0 %v1313
      %v1342 = vpop.xlane.xlu0 %1341
      %1343 = vadd.xlane.f32.xlu0 %v1314
      %v1344 = vpop.xlane.xlu0 %1343
      %1345 = vadd.xlane.f32.xlu0 %v1315
      %v1346 = vpop.xlane.xlu0 %1345
      %1347 = vadd.xlane.f32.xlu0 %v1316
      %v1348 = vpop.xlane.xlu0 %1347
      %v1349 = vmax.f32 %v1318, 1e-24
      %v1350 = vmax.f32 %v1320, 1e-24
      %v1351 = vmax.f32 %v1322, 1e-24
      %v1352 = vmax.f32 %v1324, 1e-24
      %v1353 = vmax.f32 %v1326, 1e-24
      %v1354 = vmax.f32 %v1328, 1e-24
      %v1355 = vmax.f32 %v1330, 1e-24
      %v1356 = vmax.f32 %v1332, 1e-24
      %v1357 = vmax.f32 %v1334, 1e-24
      %v1358 = vmax.f32 %v1336, 1e-24
      %v1359 = vmax.f32 %v1338, 1e-24
      %v1360 = vmax.f32 %v1340, 1e-24
      %v1361 = vmax.f32 %v1342, 1e-24
      %v1362 = vmax.f32 %v1344, 1e-24
      %v1363 = vmax.f32 %v1346, 1e-24
      %v1364 = vmax.f32 %v1348, 1e-24
      %v1365 = vrsqrt.pop %v1349
      %v1366 = vmul.f32 %v1365, %v1349
      %v1367 = vmul.f32 %v1366, %v1365
      %v1368 = vmul.f32 0.5, %v1367
      %v1369 = vsub.f32 1.5, %v1368
      %v1370 = vmul.f32 %v1365, %v1369
      %vm1371 = vweird.f32 %v1349
      %vm1372 = vweird.f32 %v1365
      %vm1373 = vmor %vm1371, %vm1372
      %v1374 = vsel %vm1373, %v1365, %v1370
      %v1375 = vrsqrt.pop %v1350
      %v1376 = vmul.f32 %v1375, %v1350
      %v1377 = vmul.f32 %v1376, %v1375
      %v1378 = vmul.f32 0.5, %v1377
      %v1379 = vsub.f32 1.5, %v1378
      %v1380 = vmul.f32 %v1375, %v1379
      %vm1381 = vweird.f32 %v1350
      %vm1382 = vweird.f32 %v1375
      %vm1383 = vmor %vm1381, %vm1382
      %v1384 = vsel %vm1383, %v1375, %v1380
      %v1385 = vrsqrt.pop %v1351
      %v1386 = vmul.f32 %v1385, %v1351
      %v1387 = vmul.f32 %v1386, %v1385
      %v1388 = vmul.f32 0.5, %v1387
      %v1389 = vsub.f32 1.5, %v1388
      %v1390 = vmul.f32 %v1385, %v1389
      %vm1391 = vweird.f32 %v1351
      %vm1392 = vweird.f32 %v1385
      %vm1393 = vmor %vm1391, %vm1392
      %v1394 = vsel %vm1393, %v1385, %v1390
      %v1395 = vrsqrt.pop %v1352
      %v1396 = vmul.f32 %v1395, %v1352
      %v1397 = vmul.f32 %v1396, %v1395
      %v1398 = vmul.f32 0.5, %v1397
      %v1399 = vsub.f32 1.5, %v1398
      %v1400 = vmul.f32 %v1395, %v1399
      %vm1401 = vweird.f32 %v1352
      %vm1402 = vweird.f32 %v1395
      %vm1403 = vmor %vm1401, %vm1402
      %v1404 = vsel %vm1403, %v1395, %v1400
      %v1405 = vrsqrt.pop %v1353
      %v1406 = vmul.f32 %v1405, %v1353
      %v1407 = vmul.f32 %v1406, %v1405
      %v1408 = vmul.f32 0.5, %v1407
      %v1409 = vsub.f32 1.5, %v1408
      %v1410 = vmul.f32 %v1405, %v1409
      %vm1411 = vweird.f32 %v1353
      %vm1412 = vweird.f32 %v1405
      %vm1413 = vmor %vm1411, %vm1412
      %v1414 = vsel %vm1413, %v1405, %v1410
      %v1415 = vrsqrt.pop %v1354
      %v1416 = vmul.f32 %v1415, %v1354
      %v1417 = vmul.f32 %v1416, %v1415
      %v1418 = vmul.f32 0.5, %v1417
      %v1419 = vsub.f32 1.5, %v1418
      %v1420 = vmul.f32 %v1415, %v1419
      %vm1421 = vweird.f32 %v1354
      %vm1422 = vweird.f32 %v1415
      %vm1423 = vmor %vm1421, %vm1422
      %v1424 = vsel %vm1423, %v1415, %v1420
      %v1425 = vrsqrt.pop %v1355
      %v1426 = vmul.f32 %v1425, %v1355
      %v1427 = vmul.f32 %v1426, %v1425
      %v1428 = vmul.f32 0.5, %v1427
      %v1429 = vsub.f32 1.5, %v1428
      %v1430 = vmul.f32 %v1425, %v1429
      %vm1431 = vweird.f32 %v1355
      %vm1432 = vweird.f32 %v1425
      %vm1433 = vmor %vm1431, %vm1432
      %v1434 = vsel %vm1433, %v1425, %v1430
      %v1435 = vrsqrt.pop %v1356
      %v1436 = vmul.f32 %v1435, %v1356
      %v1437 = vmul.f32 %v1436, %v1435
      %v1438 = vmul.f32 0.5, %v1437
      %v1439 = vsub.f32 1.5, %v1438
      %v1440 = vmul.f32 %v1435, %v1439
      %vm1441 = vweird.f32 %v1356
      %vm1442 = vweird.f32 %v1435
      %vm1443 = vmor %vm1441, %vm1442
      %v1444 = vsel %vm1443, %v1435, %v1440
      %v1445 = vrsqrt.pop %v1357
      %v1446 = vmul.f32 %v1445, %v1357
      %v1447 = vmul.f32 %v1446, %v1445
      %v1448 = vmul.f32 0.5, %v1447
      %v1449 = vsub.f32 1.5, %v1448
      %v1450 = vmul.f32 %v1445, %v1449
      %vm1451 = vweird.f32 %v1357
      %vm1452 = vweird.f32 %v1445
      %vm1453 = vmor %vm1451, %vm1452
      %v1454 = vsel %vm1453, %v1445, %v1450
      %v1455 = vrsqrt.pop %v1358
      %v1456 = vmul.f32 %v1455, %v1358
      %v1457 = vmul.f32 %v1456, %v1455
      %v1458 = vmul.f32 0.5, %v1457
      %v1459 = vsub.f32 1.5, %v1458
      %v1460 = vmul.f32 %v1455, %v1459
      %vm1461 = vweird.f32 %v1358
      %vm1462 = vweird.f32 %v1455
      %vm1463 = vmor %vm1461, %vm1462
      %v1464 = vsel %vm1463, %v1455, %v1460
      %v1465 = vrsqrt.pop %v1359
      %v1466 = vmul.f32 %v1465, %v1359
      %v1467 = vmul.f32 %v1466, %v1465
      %v1468 = vmul.f32 0.5, %v1467
      %v1469 = vsub.f32 1.5, %v1468
      %v1470 = vmul.f32 %v1465, %v1469
      %vm1471 = vweird.f32 %v1359
      %vm1472 = vweird.f32 %v1465
      %vm1473 = vmor %vm1471, %vm1472
      %v1474 = vsel %vm1473, %v1465, %v1470
      %v1475 = vrsqrt.pop %v1360
      %v1476 = vmul.f32 %v1475, %v1360
      %v1477 = vmul.f32 %v1476, %v1475
      %v1478 = vmul.f32 0.5, %v1477
      %v1479 = vsub.f32 1.5, %v1478
      %v1480 = vmul.f32 %v1475, %v1479
      %vm1481 = vweird.f32 %v1360
      %vm1482 = vweird.f32 %v1475
      %vm1483 = vmor %vm1481, %vm1482
      %v1484 = vsel %vm1483, %v1475, %v1480
      %v1485 = vrsqrt.pop %v1361
      %v1486 = vmul.f32 %v1485, %v1361
      %v1487 = vmul.f32 %v1486, %v1485
      %v1488 = vmul.f32 0.5, %v1487
      %v1489 = vsub.f32 1.5, %v1488
      %v1490 = vmul.f32 %v1485, %v1489
      %vm1491 = vweird.f32 %v1361
      %vm1492 = vweird.f32 %v1485
      %vm1493 = vmor %vm1491, %vm1492
      %v1494 = vsel %vm1493, %v1485, %v1490
      %v1495 = vrsqrt.pop %v1362
      %v1496 = vmul.f32 %v1495, %v1362
      %v1497 = vmul.f32 %v1496, %v1495
      %v1498 = vmul.f32 0.5, %v1497
      %v1499 = vsub.f32 1.5, %v1498
      %v1500 = vmul.f32 %v1495, %v1499
      %vm1501 = vweird.f32 %v1362
      %vm1502 = vweird.f32 %v1495
      %vm1503 = vmor %vm1501, %vm1502
      %v1504 = vsel %vm1503, %v1495, %v1500
      %v1505 = vrsqrt.pop %v1363
      %v1506 = vmul.f32 %v1505, %v1363
      %v1507 = vmul.f32 %v1506, %v1505
      %v1508 = vmul.f32 0.5, %v1507
      %v1509 = vsub.f32 1.5, %v1508
      %v1510 = vmul.f32 %v1505, %v1509
      %vm1511 = vweird.f32 %v1363
      %vm1512 = vweird.f32 %v1505
      %vm1513 = vmor %vm1511, %vm1512
      %v1514 = vsel %vm1513, %v1505, %v1510
      %v1515 = vrsqrt.pop %v1364
      %v1516 = vmul.f32 %v1515, %v1364
      %v1517 = vmul.f32 %v1516, %v1515
      %v1518 = vmul.f32 0.5, %v1517
      %v1519 = vsub.f32 1.5, %v1518
      %v1520 = vmul.f32 %v1515, %v1519
      %vm1521 = vweird.f32 %v1364
      %vm1522 = vweird.f32 %v1515
      %vm1523 = vmor %vm1521, %vm1522
      %v1524 = vsel %vm1523, %v1515, %v1520
      %v1525 = vmul.f32 %v1243, %v1374
      %v1526 = vmul.f32 %v1245, %v1384
      %v1527 = vmul.f32 %v1248, %v1394
      %v1528 = vmul.f32 %v1250, %v1404
      %v1529 = vmul.f32 %v1253, %v1414
      %v1530 = vmul.f32 %v1255, %v1424
      %v1531 = vmul.f32 %v1258, %v1434
      %v1532 = vmul.f32 %v1260, %v1444
      %v1533 = vmul.f32 %v1263, %v1454
      %v1534 = vmul.f32 %v1265, %v1464
      %v1535 = vmul.f32 %v1268, %v1474
      %v1536 = vmul.f32 %v1270, %v1484
      %v1537 = vmul.f32 %v1273, %v1494
      %v1538 = vmul.f32 %v1275, %v1504
      %v1539 = vmul.f32 %v1278, %v1514
      %v1540 = vmul.f32 %v1280, %v1524
      %v1541 = vxor.u32 %v1243, 2147483648
      %v1542 = vxor.u32 %v1245, 2147483648
      %v1543 = vxor.u32 %v1248, 2147483648
      %v1544 = vxor.u32 %v1250, 2147483648
      %v1545 = vxor.u32 %v1253, 2147483648
      %v1546 = vxor.u32 %v1255, 2147483648
      %v1547 = vxor.u32 %v1258, 2147483648
      %v1548 = vxor.u32 %v1260, 2147483648
      %v1549 = vxor.u32 %v1263, 2147483648
      %v1550 = vxor.u32 %v1265, 2147483648
      %v1551 = vxor.u32 %v1268, 2147483648
      %v1552 = vxor.u32 %v1270, 2147483648
      %v1553 = vxor.u32 %v1273, 2147483648
      %v1554 = vxor.u32 %v1275, 2147483648
      %v1555 = vxor.u32 %v1278, 2147483648
      %v1556 = vxor.u32 %v1280, 2147483648
      %v1557 = vmul.f32 %v1541, 1.442695
      %v1558 = vpow.pop %v1557
      %v1559 = vmul.f32 %v1542, 1.442695
      %v1560 = vpow.pop %v1559
      %v1561 = vmul.f32 %v1543, 1.442695
      %v1562 = vpow.pop %v1561
      %v1563 = vmul.f32 %v1544, 1.442695
      %v1564 = vpow.pop %v1563
      %v1565 = vmul.f32 %v1545, 1.442695
      %v1566 = vpow.pop %v1565
      %v1567 = vmul.f32 %v1546, 1.442695
      %v1568 = vpow.pop %v1567
      %v1569 = vmul.f32 %v1547, 1.442695
      %v1570 = vpow.pop %v1569
      %v1571 = vmul.f32 %v1548, 1.442695
      %v1572 = vpow.pop %v1571
      %v1573 = vmul.f32 %v1549, 1.442695
      %v1574 = vpow.pop %v1573
      %v1575 = vmul.f32 %v1550, 1.442695
      %v1576 = vpow.pop %v1575
      %v1577 = vmul.f32 %v1551, 1.442695
      %v1578 = vpow.pop %v1577
      %v1579 = vmul.f32 %v1552, 1.442695
      %v1580 = vpow.pop %v1579
      %v1581 = vmul.f32 %v1553, 1.442695
      %v1582 = vpow.pop %v1581
      %v1583 = vmul.f32 %v1554, 1.442695
      %v1584 = vpow.pop %v1583
      %v1585 = vmul.f32 %v1555, 1.442695
      %v1586 = vpow.pop %v1585
      %v1587 = vmul.f32 %v1556, 1.442695
      %v1588 = vpow.pop %v1587
      %v1589 = vadd.f32 %v1558, 1.0
      %v1590 = vadd.f32 %v1560, 1.0
      %v1591 = vadd.f32 %v1562, 1.0
      %v1592 = vadd.f32 %v1564, 1.0
      %v1593 = vadd.f32 %v1566, 1.0
      %v1594 = vadd.f32 %v1568, 1.0
      %v1595 = vadd.f32 %v1570, 1.0
      %v1596 = vadd.f32 %v1572, 1.0
      %v1597 = vadd.f32 %v1574, 1.0
      %v1598 = vadd.f32 %v1576, 1.0
      %v1599 = vadd.f32 %v1578, 1.0
      %v1600 = vadd.f32 %v1580, 1.0
      %v1601 = vadd.f32 %v1582, 1.0
      %v1602 = vadd.f32 %v1584, 1.0
      %v1603 = vadd.f32 %v1586, 1.0
      %v1604 = vadd.f32 %v1588, 1.0
      %v1605 = vrcp.pop %v1589
      %v1606 = vmul.f32 %v1589, %v1605
      %v1607 = vsub.f32 1.0, %v1606
      %v1608 = vmul.f32 %v1605, %v1607
      %v1609 = vadd.f32 %v1605, %v1608
      %vm1610 = vweird.f32 %v1589
      %vm1611 = vweird.f32 %v1605
      %vm1612 = vmor %vm1610, %vm1611
      %v1613 = vsel %vm1612, %v1605, %v1609
      %v1614 = vand.u32 2147483647, %v1589
      %vm1615 = vcmp.eq.f32.partialorder %v1614, 8.507059e+37
      %v1616 = vand.u32 %v1589, 2147483648
      %v1617 = vor.u32 1.1754944e-38, %v1616
      %v1618 = vsel %vm1615, %v1617, %v1613
      %v1619 = vmul.f32 1.0, %v1618
      %v1620 = vrcp.pop %v1590
      %v1621 = vmul.f32 %v1590, %v1620
      %v1622 = vsub.f32 1.0, %v1621
      %v1623 = vmul.f32 %v1620, %v1622
      %v1624 = vadd.f32 %v1620, %v1623
      %vm1625 = vweird.f32 %v1590
      %vm1626 = vweird.f32 %v1620
      %vm1627 = vmor %vm1625, %vm1626
      %v1628 = vsel %vm1627, %v1620, %v1624
      %v1629 = vand.u32 2147483647, %v1590
      %vm1630 = vcmp.eq.f32.partialorder %v1629, 8.507059e+37
      %v1631 = vand.u32 %v1590, 2147483648
      %v1632 = vor.u32 1.1754944e-38, %v1631
      %v1633 = vsel %vm1630, %v1632, %v1628
      %v1634 = vmul.f32 1.0, %v1633
      %v1635 = vrcp.pop %v1591
      %v1636 = vmul.f32 %v1591, %v1635
      %v1637 = vsub.f32 1.0, %v1636
      %v1638 = vmul.f32 %v1635, %v1637
      %v1639 = vadd.f32 %v1635, %v1638
      %vm1640 = vweird.f32 %v1591
      %vm1641 = vweird.f32 %v1635
      %vm1642 = vmor %vm1640, %vm1641
      %v1643 = vsel %vm1642, %v1635, %v1639
      %v1644 = vand.u32 2147483647, %v1591
      %vm1645 = vcmp.eq.f32.partialorder %v1644, 8.507059e+37
      %v1646 = vand.u32 %v1591, 2147483648
      %v1647 = vor.u32 1.1754944e-38, %v1646
      %v1648 = vsel %vm1645, %v1647, %v1643
      %v1649 = vmul.f32 1.0, %v1648
      %v1650 = vrcp.pop %v1592
      %v1651 = vmul.f32 %v1592, %v1650
      %v1652 = vsub.f32 1.0, %v1651
      %v1653 = vmul.f32 %v1650, %v1652
      %v1654 = vadd.f32 %v1650, %v1653
      %vm1655 = vweird.f32 %v1592
      %vm1656 = vweird.f32 %v1650
      %vm1657 = vmor %vm1655, %vm1656
      %v1658 = vsel %vm1657, %v1650, %v1654
      %v1659 = vand.u32 2147483647, %v1592
      %vm1660 = vcmp.eq.f32.partialorder %v1659, 8.507059e+37
      %v1661 = vand.u32 %v1592, 2147483648
      %v1662 = vor.u32 1.1754944e-38, %v1661
      %v1663 = vsel %vm1660, %v1662, %v1658
      %v1664 = vmul.f32 1.0, %v1663
      %v1665 = vrcp.pop %v1593
      %v1666 = vmul.f32 %v1593, %v1665
      %v1667 = vsub.f32 1.0, %v1666
      %v1668 = vmul.f32 %v1665, %v1667
      %v1669 = vadd.f32 %v1665, %v1668
      %vm1670 = vweird.f32 %v1593
      %vm1671 = vweird.f32 %v1665
      %vm1672 = vmor %vm1670, %vm1671
      %v1673 = vsel %vm1672, %v1665, %v1669
      %v1674 = vand.u32 2147483647, %v1593
      %vm1675 = vcmp.eq.f32.partialorder %v1674, 8.507059e+37
      %v1676 = vand.u32 %v1593, 2147483648
      %v1677 = vor.u32 1.1754944e-38, %v1676
      %v1678 = vsel %vm1675, %v1677, %v1673
      %v1679 = vmul.f32 1.0, %v1678
      %v1680 = vrcp.pop %v1594
      %v1681 = vmul.f32 %v1594, %v1680
      %v1682 = vsub.f32 1.0, %v1681
      %v1683 = vmul.f32 %v1680, %v1682
      %v1684 = vadd.f32 %v1680, %v1683
      %vm1685 = vweird.f32 %v1594
      %vm1686 = vweird.f32 %v1680
      %vm1687 = vmor %vm1685, %vm1686
      %v1688 = vsel %vm1687, %v1680, %v1684
      %v1689 = vand.u32 2147483647, %v1594
      %vm1690 = vcmp.eq.f32.partialorder %v1689, 8.507059e+37
      %v1691 = vand.u32 %v1594, 2147483648
      %v1692 = vor.u32 1.1754944e-38, %v1691
      %v1693 = vsel %vm1690, %v1692, %v1688
      %v1694 = vmul.f32 1.0, %v1693
      %v1695 = vrcp.pop %v1595
      %v1696 = vmul.f32 %v1595, %v1695
      %v1697 = vsub.f32 1.0, %v1696
      %v1698 = vmul.f32 %v1695, %v1697
      %v1699 = vadd.f32 %v1695, %v1698
      %vm1700 = vweird.f32 %v1595
      %vm1701 = vweird.f32 %v1695
      %vm1702 = vmor %vm1700, %vm1701
      %v1703 = vsel %vm1702, %v1695, %v1699
      %v1704 = vand.u32 2147483647, %v1595
      %vm1705 = vcmp.eq.f32.partialorder %v1704, 8.507059e+37
      %v1706 = vand.u32 %v1595, 2147483648
      %v1707 = vor.u32 1.1754944e-38, %v1706
      %v1708 = vsel %vm1705, %v1707, %v1703
      %v1709 = vmul.f32 1.0, %v1708
      %v1710 = vrcp.pop %v1596
      %v1711 = vmul.f32 %v1596, %v1710
      %v1712 = vsub.f32 1.0, %v1711
      %v1713 = vmul.f32 %v1710, %v1712
      %v1714 = vadd.f32 %v1710, %v1713
      %vm1715 = vweird.f32 %v1596
      %vm1716 = vweird.f32 %v1710
      %vm1717 = vmor %vm1715, %vm1716
      %v1718 = vsel %vm1717, %v1710, %v1714
      %v1719 = vand.u32 2147483647, %v1596
      %vm1720 = vcmp.eq.f32.partialorder %v1719, 8.507059e+37
      %v1721 = vand.u32 %v1596, 2147483648
      %v1722 = vor.u32 1.1754944e-38, %v1721
      %v1723 = vsel %vm1720, %v1722, %v1718
      %v1724 = vmul.f32 1.0, %v1723
      %v1725 = vrcp.pop %v1597
      %v1726 = vmul.f32 %v1597, %v1725
      %v1727 = vsub.f32 1.0, %v1726
      %v1728 = vmul.f32 %v1725, %v1727
      %v1729 = vadd.f32 %v1725, %v1728
      %vm1730 = vweird.f32 %v1597
      %vm1731 = vweird.f32 %v1725
      %vm1732 = vmor %vm1730, %vm1731
      %v1733 = vsel %vm1732, %v1725, %v1729
      %v1734 = vand.u32 2147483647, %v1597
      %vm1735 = vcmp.eq.f32.partialorder %v1734, 8.507059e+37
      %v1736 = vand.u32 %v1597, 2147483648
      %v1737 = vor.u32 1.1754944e-38, %v1736
      %v1738 = vsel %vm1735, %v1737, %v1733
      %v1739 = vmul.f32 1.0, %v1738
      %v1740 = vrcp.pop %v1598
      %v1741 = vmul.f32 %v1598, %v1740
      %v1742 = vsub.f32 1.0, %v1741
      %v1743 = vmul.f32 %v1740, %v1742
      %v1744 = vadd.f32 %v1740, %v1743
      %vm1745 = vweird.f32 %v1598
      %vm1746 = vweird.f32 %v1740
      %vm1747 = vmor %vm1745, %vm1746
      %v1748 = vsel %vm1747, %v1740, %v1744
      %v1749 = vand.u32 2147483647, %v1598
      %vm1750 = vcmp.eq.f32.partialorder %v1749, 8.507059e+37
      %v1751 = vand.u32 %v1598, 2147483648
      %v1752 = vor.u32 1.1754944e-38, %v1751
      %v1753 = vsel %vm1750, %v1752, %v1748
      %v1754 = vmul.f32 1.0, %v1753
      %v1755 = vrcp.pop %v1599
      %v1756 = vmul.f32 %v1599, %v1755
      %v1757 = vsub.f32 1.0, %v1756
      %v1758 = vmul.f32 %v1755, %v1757
      %v1759 = vadd.f32 %v1755, %v1758
      %vm1760 = vweird.f32 %v1599
      %vm1761 = vweird.f32 %v1755
      %vm1762 = vmor %vm1760, %vm1761
      %v1763 = vsel %vm1762, %v1755, %v1759
      %v1764 = vand.u32 2147483647, %v1599
      %vm1765 = vcmp.eq.f32.partialorder %v1764, 8.507059e+37
      %v1766 = vand.u32 %v1599, 2147483648
      %v1767 = vor.u32 1.1754944e-38, %v1766
      %v1768 = vsel %vm1765, %v1767, %v1763
      %v1769 = vmul.f32 1.0, %v1768
      %v1770 = vrcp.pop %v1600
      %v1771 = vmul.f32 %v1600, %v1770
      %v1772 = vsub.f32 1.0, %v1771
      %v1773 = vmul.f32 %v1770, %v1772
      %v1774 = vadd.f32 %v1770, %v1773
      %vm1775 = vweird.f32 %v1600
      %vm1776 = vweird.f32 %v1770
      %vm1777 = vmor %vm1775, %vm1776
      %v1778 = vsel %vm1777, %v1770, %v1774
      %v1779 = vand.u32 2147483647, %v1600
      %vm1780 = vcmp.eq.f32.partialorder %v1779, 8.507059e+37
      %v1781 = vand.u32 %v1600, 2147483648
      %v1782 = vor.u32 1.1754944e-38, %v1781
      %v1783 = vsel %vm1780, %v1782, %v1778
      %v1784 = vmul.f32 1.0, %v1783
      %v1785 = vrcp.pop %v1601
      %v1786 = vmul.f32 %v1601, %v1785
      %v1787 = vsub.f32 1.0, %v1786
      %v1788 = vmul.f32 %v1785, %v1787
      %v1789 = vadd.f32 %v1785, %v1788
      %vm1790 = vweird.f32 %v1601
      %vm1791 = vweird.f32 %v1785
      %vm1792 = vmor %vm1790, %vm1791
      %v1793 = vsel %vm1792, %v1785, %v1789
      %v1794 = vand.u32 2147483647, %v1601
      %vm1795 = vcmp.eq.f32.partialorder %v1794, 8.507059e+37
      %v1796 = vand.u32 %v1601, 2147483648
      %v1797 = vor.u32 1.1754944e-38, %v1796
      %v1798 = vsel %vm1795, %v1797, %v1793
      %v1799 = vmul.f32 1.0, %v1798
      %v1800 = vrcp.pop %v1602
      %v1801 = vmul.f32 %v1602, %v1800
      %v1802 = vsub.f32 1.0, %v1801
      %v1803 = vmul.f32 %v1800, %v1802
      %v1804 = vadd.f32 %v1800, %v1803
      %vm1805 = vweird.f32 %v1602
      %vm1806 = vweird.f32 %v1800
      %vm1807 = vmor %vm1805, %vm1806
      %v1808 = vsel %vm1807, %v1800, %v1804
      %v1809 = vand.u32 2147483647, %v1602
      %vm1810 = vcmp.eq.f32.partialorder %v1809, 8.507059e+37
      %v1811 = vand.u32 %v1602, 2147483648
      %v1812 = vor.u32 1.1754944e-38, %v1811
      %v1813 = vsel %vm1810, %v1812, %v1808
      %v1814 = vmul.f32 1.0, %v1813
      %v1815 = vrcp.pop %v1603
      %v1816 = vmul.f32 %v1603, %v1815
      %v1817 = vsub.f32 1.0, %v1816
      %v1818 = vmul.f32 %v1815, %v1817
      %v1819 = vadd.f32 %v1815, %v1818
      %vm1820 = vweird.f32 %v1603
      %vm1821 = vweird.f32 %v1815
      %vm1822 = vmor %vm1820, %vm1821
      %v1823 = vsel %vm1822, %v1815, %v1819
      %v1824 = vand.u32 2147483647, %v1603
      %vm1825 = vcmp.eq.f32.partialorder %v1824, 8.507059e+37
      %v1826 = vand.u32 %v1603, 2147483648
      %v1827 = vor.u32 1.1754944e-38, %v1826
      %v1828 = vsel %vm1825, %v1827, %v1823
      %v1829 = vmul.f32 1.0, %v1828
      %v1830 = vrcp.pop %v1604
      %v1831 = vmul.f32 %v1604, %v1830
      %v1832 = vsub.f32 1.0, %v1831
      %v1833 = vmul.f32 %v1830, %v1832
      %v1834 = vadd.f32 %v1830, %v1833
      %vm1835 = vweird.f32 %v1604
      %vm1836 = vweird.f32 %v1830
      %vm1837 = vmor %vm1835, %vm1836
      %v1838 = vsel %vm1837, %v1830, %v1834
      %v1839 = vand.u32 2147483647, %v1604
      %vm1840 = vcmp.eq.f32.partialorder %v1839, 8.507059e+37
      %v1841 = vand.u32 %v1604, 2147483648
      %v1842 = vor.u32 1.1754944e-38, %v1841
      %v1843 = vsel %vm1840, %v1842, %v1838
      %v1844 = vmul.f32 1.0, %v1843
      %v1845 = vsel %vm1284, %v1525, %v1619
      %v1846 = vsel %vm1284, %v1526, %v1634
      %v1847 = vsel %vm1284, %v1527, %v1649
      %v1848 = vsel %vm1284, %v1528, %v1664
      %v1849 = vsel %vm1284, %v1529, %v1679
      %v1850 = vsel %vm1284, %v1530, %v1694
      %v1851 = vsel %vm1284, %v1531, %v1709
      %v1852 = vsel %vm1284, %v1532, %v1724
      %v1853 = vsel %vm1284, %v1533, %v1739
      %v1854 = vsel %vm1284, %v1534, %v1754
      %v1855 = vsel %vm1284, %v1535, %v1769
      %v1856 = vsel %vm1284, %v1536, %v1784
      %v1857 = vsel %vm1284, %v1537, %v1799
      %v1858 = vsel %vm1284, %v1538, %v1814
      %v1859 = vsel %vm1284, %v1539, %v1829
      %v1860 = vsel %vm1284, %v1540, %v1844
      %v1861 = vpack.c.bf16 %v1845, %v1845
      %v1862 = vpack.c.bf16 %v1846, %v1846
      %v1863 = vpack.c.bf16 %v1847, %v1847
      %v1864 = vpack.c.bf16 %v1848, %v1848
      %v1865 = vpack.c.bf16 %v1849, %v1849
      %v1866 = vpack.c.bf16 %v1850, %v1850
      %v1867 = vpack.c.bf16 %v1851, %v1851
      %v1868 = vpack.c.bf16 %v1852, %v1852
      %v1869 = vpack.c.bf16 %v1853, %v1853
      %v1870 = vpack.c.bf16 %v1854, %v1854
      %v1871 = vpack.c.bf16 %v1855, %v1855
      %v1872 = vpack.c.bf16 %v1856, %v1856
      %v1873 = vpack.c.bf16 %v1857, %v1857
      %v1874 = vpack.c.bf16 %v1858, %v1858
      %v1875 = vpack.c.bf16 %v1859, %v1859
      %v1876 = vpack.c.bf16 %v1860, %v1860
      %1877 = vst [vmem:[%s306] sm:$0xf] %v1861
      %1878 = vst [vmem:[%s306 + $0x4] sm:$0xf] %v1862
      %1879 = vst [vmem:[%s306 + $0x8] sm:$0xf] %v1863
      %1880 = vst [vmem:[%s306 + $0xc] sm:$0xf] %v1864
      %1881 = vst [vmem:[%s306 + $0x10] sm:$0xf] %v1865
      %1882 = vst [vmem:[%s306 + $0x14] sm:$0xf] %v1866
      %1883 = vst [vmem:[%s306 + $0x18] sm:$0xf] %v1867
      %1884 = vst [vmem:[%s306 + $0x1c] sm:$0xf] %v1868
      %1885 = vst [vmem:[%s306 + $0x20] sm:$0xf] %v1869
      %1886 = vst [vmem:[%s306 + $0x24] sm:$0xf] %v1870
      %1887 = vst [vmem:[%s306 + $0x28] sm:$0xf] %v1871
      %1888 = vst [vmem:[%s306 + $0x2c] sm:$0xf] %v1872
      %1889 = vst [vmem:[%s306 + $0x30] sm:$0xf] %v1873
      %1890 = vst [vmem:[%s306 + $0x34] sm:$0xf] %v1874
      %1891 = vst [vmem:[%s306 + $0x38] sm:$0xf] %v1875
      %1892 = vst [vmem:[%s306 + $0x3c] sm:$0xf] %v1876
      %s1893 = smul.u32 16, %s22
      %p1894 = scmp.lt.s32.totalorder %s21, 1
      %s1895 = scalar_select %p1894, %s21, 1
      %p1896 = scmp.lt.s32.totalorder %s1893, 15
      %s1897 = scalar_select %p1896, %s1893, 15
      %s1898 = smul.addr %s1895, 16
      %s1899 = sadd.s32 %s1897, %s1898
      %s1900 = smul.addr %s1899, 4
      %s1901 = scalar_lea.vmem %s6, %s1900
      // Predicated region
      $region45: #{vp2p_forward.3} parent=43 // pred_check
        %p1902 = pneg %p187
      $region46: #{vp2p_forward.3} parent=43 // pred_check_branch
        %1904 = sbr.rel (%p1902) target = $region48
      $region47: #{vp2p_forward.3} parent=43 // pred_region
        %s1905 = smul.u32 16, %s22
      $region48: #{vp2p_forward.3} parent=43 // pred_fallthru
        _
    $region44: #{vp2p_forward.3} parent=5 // pred_fallthru
      _
    %p1906 = scmp.le.s32.totalorder 2, %s12
    // Predicated region
    $region49: #{vp2p_forward.3} parent=5 // pred_check
      %p1907 = pneg %p1906
    $region50: #{vp2p_forward.3} parent=5 // pred_check_branch
      %1909 = sbr.rel (%p1907) target = $region52
    $region51: #{vp2p_forward.3} parent=5 // pred_region
      %s1910 = ssub.s32 %s12, 2
      // Predicated region
      $region53: #{vp2p_forward.3} parent=51 // pred_check
        %p1911 = pneg %p193
      $region54: #{vp2p_forward.3} parent=51 // pred_check_branch
        %1913 = sbr.rel (%p1911) target = $region56
      $region55: #{vp2p_forward.3} parent=51 // pred_region
        %s1914 = smul.u32 16, %s24
        %p1915 = scmp.lt.s32.totalorder %s23, 1
        %s1916 = scalar_select %p1915, %s23, 1
        %p1917 = scmp.lt.s32.totalorder %s1914, 15
        %s1918 = scalar_select %p1917, %s1914, 15
        %s1919 = smul.addr %s1916, 16
        %s1920 = sadd.s32 %s1918, %s1919
        %s1921 = smul.addr %s1920, 4
        %s1922 = scalar_lea.vmem %s6, %s1921
      $region56: #{vp2p_forward.3} parent=51 // pred_fallthru
        _
    $region52: #{vp2p_forward.3} parent=5 // pred_fallthru
      _
  $region6: #{vp2p_forward.3} parent=0 // loop_footer
    %s16 = sadd.s32 1, %s12
  $region7: #{vp2p_forward.3} parent=0 // loop_footer_branch
    %11 = sbr.rel target = $region3
  $region8: #{vp2p_forward.3} parent=0 // loop_exit
    _

</llo_original>
